<compile_context>
chip_gen: v6e
topology: v6e:2x2x1
jax: 0.10.0
libtpu: 0.0.40
codegen_flags: <defaults>
</compile_context>

<pallas_src>
import functools
import math

import jax
import jax.numpy as jnp
from jax import lax
from jax.experimental import pallas as pl
from jax.experimental.pallas import tpu as pltpu


# ----------------------------------------------------------------------------
# Pass 1 kernel: pool + conv (MXU) + streamed BN statistics (from vregs).
# ----------------------------------------------------------------------------
def _stage1_kernel(xt_ref, w_ref, mask_ref, y_ref, ssum_ref, ssq_ref, *, cin):
    # xt_ref : (1, 6*cin, S)   S = T*Wq (multiple of 128, spatial on lanes)
    #          sublane index = pc*3*cin + ki*cin + c
    #          value         = xpad[c, 2*io + ki, 2*j + pc], lane = io*Wq + j
    r = pl.program_id(2)
    cin3 = 3 * cin

    xt = xt_ref[0]                        # (6*cin, S)
    w = w_ref[...]                        # (cout, 9*cin), cols ordered (kj,ki,c)
    mask = mask_ref[...]                  # (1, S): 1.0 on real output columns

    lanes = xt.shape[1]
    # "shift left by one output column": rolled[:, p] == pc0[:, p + 1].
    # Wrap-around only lands on masked padding lanes (requires wq >= wo + 1).
    pc0 = xt[0:cin3]
    rolled = pltpu.roll(pc0, shift=lanes - 1, axis=1)

    # conv taps: kj=0 -> pc0 planes, kj=1 -> pc1 planes, kj=2 -> rolled pc0.
    # Splitting the matmul avoids materializing a concatenated im2col slab.
    conv = (jnp.dot(w[:, : 2 * cin3], xt,
                    precision=lax.Precision.HIGHEST,
                    preferred_element_type=jnp.float32) +
            jnp.dot(w[:, 2 * cin3:], rolled,
                    precision=lax.Precision.HIGHEST,
                    preferred_element_type=jnp.float32))        # (cout, S)

    # MaxPool2d(2,2): x[2io+a, 2jo+b] == xpad[2io+a+1, 2jo+b+1]
    pool = jnp.maximum(
        jnp.maximum(xt[cin3 + cin: cin3 + 2 * cin],       # (a,b) = (0,0)
                    xt[cin3 + 2 * cin: cin3 + 3 * cin]),  # (1,0)
        jnp.maximum(rolled[cin: 2 * cin],                 # (0,1)
                    rolled[2 * cin: 3 * cin]))            # (1,1)

    pool = pool * mask
    conv = conv * mask

    # write the two channel groups directly (no 16-channel concatenate)
    y_ref[:, 0:cin, :] = pool[None]
    y_ref[:, cin:, :] = conv[None]

    # streamed per-channel sum / sum-of-squares for training-mode BatchNorm.
    # Computed from the values already in vregs; the (1,1,16,1) accumulator
    # blocks stay VMEM-resident across r and are written back once per (i,hh).
    @pl.when(r == 0)
    def _():
        ssum_ref[...] = jnp.zeros_like(ssum_ref)
        ssq_ref[...] = jnp.zeros_like(ssq_ref)

    ps = jnp.sum(pool, axis=1, keepdims=True)             # (cin, 1)
    cs = jnp.sum(conv, axis=1, keepdims=True)             # (cout, 1)
    pq = jnp.sum(pool * pool, axis=1, keepdims=True)
    cq = jnp.sum(conv * conv, axis=1, keepdims=True)
    ssum_ref[...] = ssum_ref[...] + jnp.concatenate([ps, cs], axis=0)[None, None]
    ssq_ref[...] = ssq_ref[...] + jnp.concatenate([pq, cq], axis=0)[None, None]


# ----------------------------------------------------------------------------
# Pass 2 kernel: fused BN affine (pre-folded scale/shift) + per-channel PReLU.
# ----------------------------------------------------------------------------
def _stage2_kernel(y_ref, scale_ref, shift_ref, alpha_ref, o_ref):
    wo = o_ref.shape[3]
    y = y_ref[:, :, :, 0:wo]                  # drop width padding on load
    v = y * scale_ref[...] + shift_ref[...]
    o_ref[...] = jnp.where(v > 0, v, alpha_ref[...] * v)


# ----------------------------------------------------------------------------
# Tiling / VMEM helpers (generation-aware).
# ----------------------------------------------------------------------------
def _vmem_capacity_bytes():
    try:
        cap = getattr(pltpu.get_tpu_info(), "vmem_capacity_bytes", None)
        if cap:
            return int(cap)
    except Exception:
        pass
    return 64 * (1 << 20)        # conservative default (v7x per-core VMEM)


def _padded_width(t, wo):
    # lane block T*Wq must be a multiple of 128; Wq must be >= Wo + 1 so the
    # kj==2 / pool b==1 roll stays inside the row's own (masked) segment.
    g = 128 // math.gcd(t, 128)
    return ((wo + 1 + g - 1) // g) * g


def _est_step_bytes(cin, s):
    # double-buffered xtap (6*cin rows) and y (16 rows) blocks plus live
    # in-kernel temporaries (rolled pc0 planes, pool, conv, headroom), f32.
    return (16 * cin + 64) * s * 4


def _row_tile(ho, wo, cin, tile_rows, budget):
    if tile_rows is not None:
        t = int(tile_rows)
        assert ho % t == 0, "tile_rows must divide H//2"
        return t, _padded_width(t, wo)
    cands = []
    for t in range(1, ho + 1):
        if ho % t:
            continue
        wq = _padded_width(t, wo)
        cands.append((t, wq, t * wq))
    fitting = [c for c in cands if _est_step_bytes(cin, c[2]) <= budget]
    if fitting:
        # prefer lane extents >= ~1K (HBM-roofline regime), then minimal width
        # padding (fewer HBM bytes for xtap / y), then bigger tiles.
        t, wq, _ = max(fitting, key=lambda c: (c[2] >= 1024, -c[1], c[0]))
    else:
        t, wq, _ = min(cands, key=lambda c: c[2])
    return t, wq


def _stage2_rows(ho, wo, wq, budget):
    def est(t2):
        return 16 * t2 * (wq + wo) * 4 * 4     # in+out blocks, double-buffered
    cands = [ho] + [t for t in range(8, ho, 8) if ho % t == 0]
    fitting = [t for t in cands if est(t) <= budget]
    if fitting:
        return max(fitting)
    return min(cands)


# ----------------------------------------------------------------------------
# Wrapper.
# ----------------------------------------------------------------------------
def initial_block(x, w, b, gamma, beta, alpha, *, tile_rows=None, eps=1e-5):
    """x: (N, C_in, H, W) float32, NCHW.  Returns (N, 16, H//2, W//2)."""
    n, cin, h, wd = x.shape
    assert h % 2 == 0 and wd % 2 == 0, "even spatial dims assumed"
    assert 0 < cin < 16
    cout = 16 - cin
    assert w.shape == (cout, cin, 3, 3)
    ho, wo = h // 2, wd // 2

    vmem_cap = _vmem_capacity_bytes()
    # v5e/v6e (128 MiB VMEM): ~24 MiB per-step working set; v7x (64 MiB): ~13.
    budget = max(2 << 20, min(vmem_cap // 5, 24 << 20))

    t, wq = _row_tile(ho, wo, cin, tile_rows, budget)
    s = t * wq
    assert s % 128 == 0
    assert wq >= wo + 1, "roll-based kj==2 tap requires one column of padding"
    nrb = ho // t
    cin3 = 3 * cin

    # split the row-tile axis into two parallel halves when possible so a v7x
    # megacore keeps both TensorCores busy even for N == 1.
    split = 2 if (nrb % 2 == 0 and nrb >= 2) else 1
    npr = nrb // split

    x = x.astype(jnp.float32)

    # --- row-tap x column-phase decomposition, spatial flattened onto lanes --
    # xtap[n, pc*3*cin + ki*cin + c, io*wq + j] == xpad[n, c, 2*io+ki, 2*j+pc]
    # TODO(synk): replace this HBM relayout (~1.5x extra input write+read) with
    # in-kernel manual strided DMA from the raw NCHW tensor.
    xpad = jnp.pad(x, ((0, 0), (0, 0), (1, 1), (1, 2 * wq - wd - 1)))
    planes = []
    for ki in range(3):
        rows = xpad[:, :, ki:ki + 2 * ho:2, :]              # (N, Cin, Ho, 2*Wq)
        planes.append(rows.reshape(n, cin, ho, wq, 2))      # cols -> (j, pc)
    xtap = jnp.stack(planes, axis=1)                        # (N, 3, Cin, Ho, Wq, 2)
    xtap = xtap.transpose(0, 5, 1, 2, 3, 4)                 # (N, 2, 3, Cin, Ho, Wq)
    xtap = xtap.reshape(n, 6 * cin, ho * wq)

    # weight columns ordered (kj, ki, c) to match slab = [xtap block ; rolled pc0]
    w_flat = w.astype(jnp.float32).transpose(0, 3, 2, 1).reshape(cout, 9 * cin)

    mask = jnp.tile(
        jnp.concatenate([jnp.ones((wo,), jnp.float32),
                         jnp.zeros((wq - wo,), jnp.float32)]), t)[None]  # (1,S)

    t2 = _stage2_rows(ho, wo, wq, budget)

    est1 = _est_step_bytes(cin, s)
    est2 = 16 * t2 * (wq + wo) * 4 * 4
    compiler_kwargs = {}
    if max(est1, est2) > 10 * (1 << 20):
        compiler_kwargs["vmem_limit_bytes"] = int(
            min(max(2 * max(est1, est2), 32 << 20), int(0.75 * vmem_cap)))

    # ---------------- pass 1: pool + conv + BN statistics ----------------
    y_flat, ssum, ssq = pl.pallas_call(
        functools.partial(_stage1_kernel, cin=cin),
        grid=(n, split, npr),
        in_specs=[
            pl.BlockSpec((1, 6 * cin, s), lambda i, hh, r: (i, 0, hh * npr + r)),
            pl.BlockSpec((cout, 9 * cin), lambda i, hh, r: (0, 0)),
            pl.BlockSpec((1, s), lambda i, hh, r: (0, 0)),
        ],
        out_specs=[
            pl.BlockSpec((1, 16, s), lambda i, hh, r: (i, 0, hh * npr + r)),
            pl.BlockSpec((1, 1, 16, 1), lambda i, hh, r: (i, hh, 0, 0)),
            pl.BlockSpec((1, 1, 16, 1), lambda i, hh, r: (i, hh, 0, 0)),
        ],
        out_shape=[
            jax.ShapeDtypeStruct((n, 16, ho * wq), jnp.float32),
            jax.ShapeDtypeStruct((n, split, 16, 1), jnp.float32),
            jax.ShapeDtypeStruct((n, split, 16, 1), jnp.float32),
        ],
        compiler_params=pltpu.CompilerParams(
            dimension_semantics=("parallel", "parallel", "arbitrary"),
            **compiler_kwargs),
        cost_estimate=pl.CostEstimate(
            flops=2 * n * ho * wq * 9 * cin * cout + 8 * n * cin * ho * wq,
            transcendentals=0,
            bytes_accessed=4 * (xtap.size + w_flat.size + n * 16 * ho * wq)),
    )(xtap, w_flat, mask)

    # ------------- fold BatchNorm (batch stats) into scale/shift -------------
    # Note: single-pass E[y^2]-E[y]^2 in f32; fine for normalized inputs, could
    # lose digits for huge, large-mean activations (per-tile partials would be
    # the next step if that ever matters).
    cnt = jnp.float32(n * ho * wo)
    ch_sum = jnp.sum(ssum[..., 0], axis=(0, 1))             # (16,)
    ch_sq = jnp.sum(ssq[..., 0], axis=(0, 1))               # (16,)
    mean = ch_sum / cnt
    var = jnp.maximum(ch_sq / cnt - mean * mean, 0.0)       # biased variance
    scale = gamma.astype(jnp.float32) * lax.rsqrt(var + eps)
    shift = beta.astype(jnp.float32) - mean * scale
    # The conv bias cancels exactly against the training-mode batch mean
    # ((y+b) - mean(y+b) == y - mean(y)); it is folded away entirely.
    del b

    # ---------------- pass 2: affine + PReLU, drop width padding -------------
    y4d = y_flat.reshape(n, 16, ho, wq)        # free row-major split (no copy)
    scale4 = scale.reshape(1, 16, 1, 1)
    shift4 = shift.reshape(1, 16, 1, 1)
    alpha4 = alpha.astype(jnp.float32).reshape(1, 16, 1, 1)

    out = pl.pallas_call(
        _stage2_kernel,
        grid=(n, ho // t2),
        in_specs=[
            pl.BlockSpec((1, 16, t2, wq), lambda i, r: (i, 0, r, 0)),
            pl.BlockSpec((1, 16, 1, 1), lambda i, r: (0, 0, 0, 0)),
            pl.BlockSpec((1, 16, 1, 1), lambda i, r: (0, 0, 0, 0)),
            pl.BlockSpec((1, 16, 1, 1), lambda i, r: (0, 0, 0, 0)),
        ],
        out_specs=pl.BlockSpec((1, 16, t2, wo), lambda i, r: (i, 0, r, 0)),
        out_shape=jax.ShapeDtypeStruct((n, 16, ho, wo), jnp.float32),
        compiler_params=pltpu.CompilerParams(
            dimension_semantics=("parallel", "parallel"), **compiler_kwargs),
    )(y4d, scale4, shift4, alpha4)
    return out


# ----------------------------------------------------------------------------
# Pure-JAX reference (mirrors the PyTorch forward, training-mode BatchNorm).
# ----------------------------------------------------------------------------
def initial_block_ref(x, w, b, gamma, beta, alpha, eps=1e-5):
    pool = lax.reduce_window(x, -jnp.inf, lax.max,
                             (1, 1, 2, 2), (1, 1, 2, 2), "VALID")
    conv = lax.conv_general_dilated(
        x, w, window_strides=(2, 2), padding=((1, 1), (1, 1)),
        dimension_numbers=("NCHW", "OIHW", "NCHW"),
        precision=lax.Precision.HIGHEST) + b.reshape(1, -1, 1, 1)
    y = jnp.concatenate([pool, conv], axis=1)
    mean = jnp.mean(y, axis=(0, 2, 3), keepdims=True)
    var = jnp.mean((y - mean) ** 2, axis=(0, 2, 3), keepdims=True)
    ybn = (y - mean) * lax.rsqrt(var + eps) * gamma.reshape(1, -1, 1, 1) \
          + beta.reshape(1, -1, 1, 1)
    a = alpha.reshape(1, -1, 1, 1)
    return jnp.where(ybn > 0, ybn, a * ybn)


if __name__ == "__main__":
    key = jax.random.PRNGKey(0)
    kx, kw, kb, kg, kbt = jax.random.split(key, 5)

    N, C_IN, H, W = 2, 4, 16, 16
    C_CONV = 16 - C_IN  # 12

    x = jax.random.normal(kx, (N, C_IN, H, W), jnp.float32)
    w = jax.random.normal(kw, (C_CONV, C_IN, 3, 3), jnp.float32) * 0.2
    b = jax.random.normal(kb, (C_CONV,), jnp.float32) * 0.1
    gamma = 1.0 + 0.1 * jax.random.normal(kg, (16,), jnp.float32)
    beta = 0.05 * jax.random.normal(kbt, (16,), jnp.float32)
    alpha = jnp.full((16,), 0.25, jnp.float32)  # PyTorch PReLU default init

    ref = initial_block_ref(x, w, b, gamma, beta, alpha)

    # tile_rows=2 -> grid (N=2, 2 halves, 2 row tiles per half): exercises the
    # streamed BN-stat accumulation and the megacore row-split path.
    out = jax.block_until_ready(
        initial_block(x, w, b, gamma, beta, alpha, tile_rows=2))
    assert out.shape == (N, 16, H // 2, W // 2)
    err = float(jnp.max(jnp.abs(out - ref)))
    assert jnp.allclose(out, ref, atol=2e-3, rtol=2e-3), \
        f"tiled path mismatch vs JAX reference (max abs err {err:.3e})"

    # default (auto-tiled) path
    out2 = jax.block_until_ready(initial_block(x, w, b, gamma, beta, alpha))
    err2 = float(jnp.max(jnp.abs(out2 - ref)))
    assert jnp.allclose(out2, ref, atol=2e-3, rtol=2e-3), \
        f"auto-tiled path mismatch vs JAX reference (max abs err {err2:.3e})"

    print("KERNEL_OK")
</pallas_src>

<mosaic_0001>
module attributes {stable_mosaic.version = 11 : i64} {
  func.func @_stage1_kernel(%arg0: i32, %arg1: i32, %arg2: i32, %arg3: memref<1x24x128xf32, #tpu.memory_space<vmem>>, %arg4: memref<12x36xf32, #tpu.memory_space<vmem>>, %arg5: memref<1x128xf32, #tpu.memory_space<vmem>>, %arg6: memref<1x16x128xf32, #tpu.memory_space<vmem>>, %arg7: memref<1x1x16x1xf32, #tpu.memory_space<vmem>>, %arg8: memref<1x1x16x1xf32, #tpu.memory_space<vmem>>) attributes {dimension_semantics = [#tpu.dimension_semantics<parallel>, #tpu.dimension_semantics<parallel>, #tpu.dimension_semantics<arbitrary>], iteration_bounds = array<i64: 2, 2, 2>, scalar_prefetch = 0 : i64, scratch_operands = 0 : i64, tpu.core_type = #tpu.core_type<tc>, window_params = [{transform_indices = @transform_0, window_bounds = array<i64: 1, 24, 128>}, {pipeline_mode = #tpu.pipeline_mode<synchronous>, transform_indices = @transform_1, window_bounds = array<i64: 12, 36>}, {pipeline_mode = #tpu.pipeline_mode<synchronous>, transform_indices = @transform_2, window_bounds = array<i64: 1, 128>}, {transform_indices = @transform_3, window_bounds = array<i64: 1, 16, 128>}, {transform_indices = @transform_4, window_bounds = array<i64: 1, 1, 16, 1>}, {transform_indices = @transform_5, window_bounds = array<i64: 1, 1, 16, 1>}]} {
    %c0 = arith.constant 0 : index
    %c0_0 = arith.constant 0 : index
    %c0_1 = arith.constant 0 : index
    %0 = vector.load %arg3[%c0, %c0_0, %c0_1] : memref<1x24x128xf32, #tpu.memory_space<vmem>>, vector<1x24x128xf32>
    %1 = vector.shape_cast %0 : vector<1x24x128xf32> to vector<24x128xf32>
    %c0_2 = arith.constant 0 : index
    %c0_3 = arith.constant 0 : index
    %2 = vector.load %arg4[%c0_2, %c0_3] : memref<12x36xf32, #tpu.memory_space<vmem>>, vector<12x36xf32>
    %c0_4 = arith.constant 0 : index
    %c0_5 = arith.constant 0 : index
    %3 = vector.load %arg5[%c0_4, %c0_5] : memref<1x128xf32, #tpu.memory_space<vmem>>, vector<1x128xf32>
    %4 = vector.extract_strided_slice %1 {offsets = [0, 0], sizes = [12, 128], strides = [1, 1]} : vector<24x128xf32> to vector<12x128xf32>
    %c127_i32 = arith.constant 127 : i32
    %5 = tpu.dynamic_rotate %4 by %c127_i32 dim 1 : vector<12x128xf32>, i32 -> vector<12x128xf32>
    %6 = vector.extract_strided_slice %2 {offsets = [0, 0], sizes = [12, 24], strides = [1, 1]} : vector<12x36xf32> to vector<12x24xf32>
    %cst = arith.constant dense<0.000000e+00> : vector<12x128xf32>
    %7 = tpu.matmul %6, %1, %cst {dimension_numbers = #tpu.dot_dimension_numbers<[1], [0], [0], [1], [0, 0, 1, 1], [], []>, precision = #tpu.contract_precision<fp32>} : vector<12x24xf32>, vector<24x128xf32>, vector<12x128xf32> -> vector<12x128xf32>
    %8 = vector.extract_strided_slice %2 {offsets = [0, 24], sizes = [12, 12], strides = [1, 1]} : vector<12x36xf32> to vector<12x12xf32>
    %cst_6 = arith.constant dense<0.000000e+00> : vector<12x128xf32>
    %9 = tpu.matmul %8, %5, %cst_6 {dimension_numbers = #tpu.dot_dimension_numbers<[1], [0], [0], [1], [0, 0, 1, 1], [], []>, precision = #tpu.contract_precision<fp32>} : vector<12x12xf32>, vector<12x128xf32>, vector<12x128xf32> -> vector<12x128xf32>
    %10 = arith.addf %7, %9 : vector<12x128xf32>
    %11 = vector.extract_strided_slice %1 {offsets = [16, 0], sizes = [4, 128], strides = [1, 1]} : vector<24x128xf32> to vector<4x128xf32>
    %12 = vector.extract_strided_slice %1 {offsets = [20, 0], sizes = [4, 128], strides = [1, 1]} : vector<24x128xf32> to vector<4x128xf32>
    %13 = arith.maximumf %11, %12 : vector<4x128xf32>
    %14 = vector.extract_strided_slice %5 {offsets = [4, 0], sizes = [4, 128], strides = [1, 1]} : vector<12x128xf32> to vector<4x128xf32>
    %15 = vector.extract_strided_slice %5 {offsets = [8, 0], sizes = [4, 128], strides = [1, 1]} : vector<12x128xf32> to vector<4x128xf32>
    %16 = arith.maximumf %14, %15 : vector<4x128xf32>
    %17 = arith.maximumf %13, %16 : vector<4x128xf32>
    %18 = vector.broadcast %3 : vector<1x128xf32> to vector<4x128xf32>
    %19 = arith.mulf %17, %18 : vector<4x128xf32>
    %20 = vector.broadcast %3 : vector<1x128xf32> to vector<12x128xf32>
    %21 = arith.mulf %10, %20 : vector<12x128xf32>
    %22 = vector.shape_cast %19 : vector<4x128xf32> to vector<1x4x128xf32>
    %c0_7 = arith.constant 0 : index
    %c0_8 = arith.constant 0 : index
    %c0_9 = arith.constant 0 : index
    %23 = vector.load %arg6[%c0_7, %c0_8, %c0_9] : memref<1x16x128xf32, #tpu.memory_space<vmem>>, vector<1x4x128xf32>
    tpu.vector_store %arg6[%c0_7, %c0_8, %c0_9], %22 {strides = array<i32>} : memref<1x16x128xf32, #tpu.memory_space<vmem>>, vector<1x4x128xf32>,
    %24 = vector.shape_cast %21 : vector<12x128xf32> to vector<1x12x128xf32>
    %c0_10 = arith.constant 0 : index
    %c4 = arith.constant 4 : index
    %c0_11 = arith.constant 0 : index
    %25 = vector.load %arg6[%c0_10, %c4, %c0_11] : memref<1x16x128xf32, #tpu.memory_space<vmem>>, vector<1x12x128xf32>
    tpu.vector_store %arg6[%c0_10, %c4, %c0_11], %24 {strides = array<i32>} : memref<1x16x128xf32, #tpu.memory_space<vmem>>, vector<1x12x128xf32>,
    %c0_i32 = arith.constant 0 : i32
    %26 = arith.cmpi eq, %arg2, %c0_i32 : i32
    %27 = arith.extui %26 : i1 to i32
    %c0_i32_12 = arith.constant 0 : i32
    %28 = arith.cmpi ne, %27, %c0_i32_12 : i32
    scf.if %28 {
      %cst_33 = arith.constant 0.000000e+00 : f32
      %49 = vector.broadcast %cst_33 : f32 to vector<1x1x16x1xf32>
      %c0_34 = arith.constant 0 : index
      %c0_35 = arith.constant 0 : index
      %c0_36 = arith.constant 0 : index
      %c0_37 = arith.constant 0 : index
      %50 = vector.load %arg7[%c0_34, %c0_35, %c0_36, %c0_37] : memref<1x1x16x1xf32, #tpu.memory_space<vmem>>, vector<1x1x16x1xf32>
      tpu.vector_store %arg7[%c0_34, %c0_35, %c0_36, %c0_37], %49 {strides = array<i32>} : memref<1x1x16x1xf32, #tpu.memory_space<vmem>>, vector<1x1x16x1xf32>,
      %cst_38 = arith.constant 0.000000e+00 : f32
      %51 = vector.broadcast %cst_38 : f32 to vector<1x1x16x1xf32>
      %c0_39 = arith.constant 0 : index
      %c0_40 = arith.constant 0 : index
      %c0_41 = arith.constant 0 : index
      %c0_42 = arith.constant 0 : index
      %52 = vector.load %arg8[%c0_39, %c0_40, %c0_41, %c0_42] : memref<1x1x16x1xf32, #tpu.memory_space<vmem>>, vector<1x1x16x1xf32>
      tpu.vector_store %arg8[%c0_39, %c0_40, %c0_41, %c0_42], %51 {strides = array<i32>} : memref<1x1x16x1xf32, #tpu.memory_space<vmem>>, vector<1x1x16x1xf32>,
    } else {
    }
    %cst_13 = arith.constant dense<0.000000e+00> : vector<4xf32>
    %29 = vector.multi_reduction <add>, %19, %cst_13 [1] : vector<4x128xf32> to vector<4xf32>
    %30 = vector.shape_cast %29 : vector<4xf32> to vector<4x1xf32>
    %cst_14 = arith.constant dense<0.000000e+00> : vector<12xf32>
    %31 = vector.multi_reduction <add>, %21, %cst_14 [1] : vector<12x128xf32> to vector<12xf32>
    %32 = vector.shape_cast %31 : vector<12xf32> to vector<12x1xf32>
    %33 = arith.mulf %19, %19 : vector<4x128xf32>
    %cst_15 = arith.constant dense<0.000000e+00> : vector<4xf32>
    %34 = vector.multi_reduction <add>, %33, %cst_15 [1] : vector<4x128xf32> to vector<4xf32>
    %35 = vector.shape_cast %34 : vector<4xf32> to vector<4x1xf32>
    %36 = arith.mulf %21, %21 : vector<12x128xf32>
    %cst_16 = arith.constant dense<0.000000e+00> : vector<12xf32>
    %37 = vector.multi_reduction <add>, %36, %cst_16 [1] : vector<12x128xf32> to vector<12xf32>
    %38 = vector.shape_cast %37 : vector<12xf32> to vector<12x1xf32>
    %c0_17 = arith.constant 0 : index
    %c0_18 = arith.constant 0 : index
    %c0_19 = arith.constant 0 : index
    %c0_20 = arith.constant 0 : index
    %39 = vector.load %arg7[%c0_17, %c0_18, %c0_19, %c0_20] : memref<1x1x16x1xf32, #tpu.memory_space<vmem>>, vector<1x1x16x1xf32>
    %40 = tpu.concatenate %30, %32 in 0 : vector<4x1xf32>, vector<12x1xf32> -> vector<16x1xf32>
    %41 = vector.shape_cast %40 : vector<16x1xf32> to vector<1x1x16x1xf32>
    %42 = arith.addf %39, %41 : vector<1x1x16x1xf32>
    %c0_21 = arith.constant 0 : index
    %c0_22 = arith.constant 0 : index
    %c0_23 = arith.constant 0 : index
    %c0_24 = arith.constant 0 : index
    %43 = vector.load %arg7[%c0_21, %c0_22, %c0_23, %c0_24] : memref<1x1x16x1xf32, #tpu.memory_space<vmem>>, vector<1x1x16x1xf32>
    tpu.vector_store %arg7[%c0_21, %c0_22, %c0_23, %c0_24], %42 {strides = array<i32>} : memref<1x1x16x1xf32, #tpu.memory_space<vmem>>, vector<1x1x16x1xf32>,
    %c0_25 = arith.constant 0 : index
    %c0_26 = arith.constant 0 : index
    %c0_27 = arith.constant 0 : index
    %c0_28 = arith.constant 0 : index
    %44 = vector.load %arg8[%c0_25, %c0_26, %c0_27, %c0_28] : memref<1x1x16x1xf32, #tpu.memory_space<vmem>>, vector<1x1x16x1xf32>
    %45 = tpu.concatenate %35, %38 in 0 : vector<4x1xf32>, vector<12x1xf32> -> vector<16x1xf32>
    %46 = vector.shape_cast %45 : vector<16x1xf32> to vector<1x1x16x1xf32>
    %47 = arith.addf %44, %46 : vector<1x1x16x1xf32>
    %c0_29 = arith.constant 0 : index
    %c0_30 = arith.constant 0 : index
    %c0_31 = arith.constant 0 : index
    %c0_32 = arith.constant 0 : index
    %48 = vector.load %arg8[%c0_29, %c0_30, %c0_31, %c0_32] : memref<1x1x16x1xf32, #tpu.memory_space<vmem>>, vector<1x1x16x1xf32>
    tpu.vector_store %arg8[%c0_29, %c0_30, %c0_31, %c0_32], %47 {strides = array<i32>} : memref<1x1x16x1xf32, #tpu.memory_space<vmem>>, vector<1x1x16x1xf32>,
    return
  }
  func.func @transform_0(%arg0: i32, %arg1: i32, %arg2: i32) -> (i32, i32, i32) {
    %c2_i32 = arith.constant 2 : i32
    %0 = arith.muli %arg1, %c2_i32 : i32
    %1 = arith.addi %0, %arg2 : i32
    %c0_i32 = arith.constant 0 : i32
    %c0_i32_0 = arith.constant 0 : i32
    return %arg0, %c0_i32, %1 : i32, i32, i32
  }
  func.func @transform_1(%arg0: i32, %arg1: i32, %arg2: i32) -> (i32, i32) {
    %c0_i32 = arith.constant 0 : i32
    %c0_i32_0 = arith.constant 0 : i32
    %c0_i32_1 = arith.constant 0 : i32
    return %c0_i32, %c0_i32_0 : i32, i32
  }
  func.func @transform_2(%arg0: i32, %arg1: i32, %arg2: i32) -> (i32, i32) {
    %c0_i32 = arith.constant 0 : i32
    %c0_i32_0 = arith.constant 0 : i32
    %c0_i32_1 = arith.constant 0 : i32
    return %c0_i32, %c0_i32_0 : i32, i32
  }
  func.func @transform_3(%arg0: i32, %arg1: i32, %arg2: i32) -> (i32, i32, i32) {
    %c2_i32 = arith.constant 2 : i32
    %0 = arith.muli %arg1, %c2_i32 : i32
    %1 = arith.addi %0, %arg2 : i32
    %c0_i32 = arith.constant 0 : i32
    %c0_i32_0 = arith.constant 0 : i32
    return %arg0, %c0_i32, %1 : i32, i32, i32
  }
  func.func @transform_4(%arg0: i32, %arg1: i32, %arg2: i32) -> (i32, i32, i32, i32) {
    %c0_i32 = arith.constant 0 : i32
    %c0_i32_0 = arith.constant 0 : i32
    %c0_i32_1 = arith.constant 0 : i32
    return %arg0, %arg1, %c0_i32, %c0_i32_0 : i32, i32, i32, i32
  }
  func.func @transform_5(%arg0: i32, %arg1: i32, %arg2: i32) -> (i32, i32, i32, i32) {
    %c0_i32 = arith.constant 0 : i32
    %c0_i32_0 = arith.constant 0 : i32
    %c0_i32_1 = arith.constant 0 : i32
    return %arg0, %arg1, %c0_i32, %c0_i32_0 : i32, i32, i32, i32
  }
}

</mosaic_0001>

<llo_original>
// kernel: tpu_custom_call.1
$region0: #{tpu_custom_call.1}
  #allocation0 [shape = 'u32[]', space=smem, size = 0x4, offset = 0x4, fixed_abs, tag = 'smem constant byte address 0x4 - core index']
  #allocation1 [shape = 'u32[144,128]{1,0:T(1,128)}', space=vmem, size = 0x12000, scoped, tag = 'internal scratch']
  %s0 = inlined_call_operand.hbm [shape: f32[2,24,512], index: 0, kind: input, shape index: {}]
  %s1 = inlined_call_operand.hbm [shape: f32[12,36], index: 1, kind: input, shape index: {}]
  %s2 = inlined_call_operand.vmem [shape: f32[1,128], index: 2, kind: input, shape index: {}]
  %s3 = inlined_call_operand.hbm [shape: f32[2,16,512], index: 3, kind: output, shape index: {0}]
  %s4 = inlined_call_operand.vmem [shape: f32[2,2,16,1], index: 4, kind: output, shape index: {1}]
  %s5 = inlined_call_operand.vmem [shape: f32[2,2,16,1], index: 5, kind: output, shape index: {2}]
  %6 = xla_tuple %s3, %s4, %s5
  %s7 = sld [smem:[#allocation0]]
  $region73: #{tpu_custom_call.1} parent=0
    _
  %s9 = ssub.s32 1, %s7
  %s10 = scalar_select 0, %s9, %s7
  $region1: #{tpu_custom_call.1} parent=0
    #allocation2 [shape = 'u8[24576]{0}', space=vmem, size = 0x6000, scoped, tag = 'input window, operand 0']
    #allocation3 [shape = 's32[2]{0}', space=sflag, size = 0x8, scoped, tag = 'scoped memory for tpu_custom_call.1']
    #allocation4 [shape = 's32[2]{0}', space=sflag, size = 0x8, scoped, tag = 'scoped memory for tpu_custom_call.1']
    #allocation5 [shape = 'u8[8192]{0}', space=vmem, size = 0x2000, scoped, tag = 'input window, operand 1, single buffered']
    #allocation6 [shape = 's32[1]{0}', space=sflag, size = 0x4, scoped, tag = 'scoped memory for tpu_custom_call.1']
    #allocation7 [shape = 'u8[16384]{0}', space=vmem, size = 0x4000, scoped, tag = 'output window, operand 0']
    %11 = vsyncpa [#allocation3], 0
    %s12 = scalar_lea.sflag [#allocation3], 1
    %13 = vsyncpa %s12, 0
    %14 = vsyncpa [#allocation6], 0
    %15 = vsyncpa [#allocation4], 0
    %s16 = scalar_lea.sflag [#allocation4], 1
    %17 = vsyncpa %s16, 0
    loop: start=0, step=1, limit=10
    $region2: #{tpu_custom_call.1} parent=1 // loop_pre_header
      _
    $region3: #{tpu_custom_call.1} parent=1 // loop_header
      %s19 = sphi 0, %s23
      %p20 = scmp.ge.s32.totalorder %s19, 10
      %s26 = sphi 0, %s45
      %s27 = sphi 0, %s41
      %s28 = sphi 0, %s37
      %s29 = sphi 0, %s26
      %s30 = sphi 0, %s27
      %s31 = sphi 0, %s28
      %s32 = sphi 0, %s29
      %s33 = sphi 0, %s30
      %s34 = sphi 0, %s31
      %s54 = sphi 0, %s56
      %s57 = sphi 0, %s54
      %s58 = sphi 0, %s57
      %s74 = sphi 0, %s58
      %s78 = sphi 0, %s78
      %s80 = sphi 0, %s78
      %s81 = sphi 0, %s80
      %s95 = sphi 0, %s81
      %s99 = sphi 0, %s99
      %s101 = sphi 0, %s99
      %s102 = sphi 0, %s101
      %s116 = sphi 0, %s102
      %s128 = sphi 0, %s130
      %s131 = sphi 0, %s128
      %s132 = sphi 0, %s131
      %s148 = sphi 0, %s132
      %s156 = sphi 0, %s158
      %s159 = sphi 0, %s156
      %s160 = sphi 0, %s159
      %s176 = sphi 0, %s160
      %s184 = sphi 0, %s186
      %s187 = sphi 0, %s184
      %s188 = sphi 0, %s187
      %s204 = sphi 0, %s188
    $region4: #{tpu_custom_call.1} parent=1 // loop_header_branch
      %22 = sbr.rel (%p20) target = $region8
    $region5: #{tpu_custom_call.1} parent=1 // loop_body
      %s24 = ssub.s32 %s19, 1
      %s25 = ssub.s32 %s19, 2
      %s35 = sadd.s32 1, %s28
      %p36 = scmp.ge.s32.totalorder %s35, 2
      %s37 = scalar_select %p36, 0, %s35
      %s38 = sadd.s32 1, %s27
      %s39 = scalar_select %p36, %s38, %s27
      %p40 = scmp.ge.s32.totalorder %s39, 2
      %s41 = scalar_select %p40, 0, %s39
      %s42 = sadd.s32 1, %s26
      %s43 = scalar_select %p40, %s42, %s26
      %p44 = scmp.ge.s32.totalorder %s43, 2
      %s45 = scalar_select %p44, 0, %s43
      %s46 = smul.u32 %s27, 2
      %s47 = sadd.s32 %s46, %s28
      %s48 = smul.u32 %s41, 2
      %s49 = sadd.s32 %s48, %s37
      %s50 = ssub.s32 %s26, %s45
      %s51 = ssub.s32 %s47, %s49
      %s52 = sor.u32 %s50, %s51
      %p53 = scmp.eq.s32.totalorder %s52, 0
      %s55 = sadd.s32 %s54, 1
      %s56 = scalar_select %p53, %s54, %s55
      %p59 = pneg %p53
      %p60 = scmp.eq.s32.totalorder %s19, 7
      %p61 = por %p59, %p60
      %p62 = scmp.ne.s32.totalorder %s54, %s57
      %p63 = scmp.eq.s32.totalorder %s19, 0
      %p64 = por %p62, %p63
      %p65 = scmp.ne.s32.totalorder %s54, %s57
      %p66 = scmp.eq.s32.totalorder %s24, 7
      %p67 = por %p65, %p66
      %p68 = scmp.ne.s32.totalorder %s57, %s58
      %p69 = scmp.eq.s32.totalorder %s24, 0
      %p70 = por %p68, %p69
      %p71 = scmp.ne.s32.totalorder %s57, %s58
      %p72 = scmp.eq.s32.totalorder %s25, 7
      %p73 = por %p71, %p72
      %p75 = scmp.ne.s32.totalorder %s58, %s74
      %p76 = scmp.eq.s32.totalorder %s25, 0
      %p77 = por %p75, %p76
      %s79 = sadd.s32 %s78, 1
      %p82 = scmp.eq.s32.totalorder %s19, 7
      %p83 = scmp.ne.s32.totalorder %s78, %s80
      %p84 = scmp.eq.s32.totalorder %s19, 0
      %p85 = por %p83, %p84
      %p86 = scmp.ne.s32.totalorder %s78, %s80
      %p87 = scmp.eq.s32.totalorder %s24, 7
      %p88 = por %p86, %p87
      %p89 = scmp.ne.s32.totalorder %s80, %s81
      %p90 = scmp.eq.s32.totalorder %s24, 0
      %p91 = por %p89, %p90
      %p92 = scmp.ne.s32.totalorder %s80, %s81
      %p93 = scmp.eq.s32.totalorder %s25, 7
      %p94 = por %p92, %p93
      %p96 = scmp.ne.s32.totalorder %s81, %s95
      %p97 = scmp.eq.s32.totalorder %s25, 0
      %p98 = por %p96, %p97
      %s100 = sadd.s32 %s99, 1
      %p103 = scmp.eq.s32.totalorder %s19, 7
      %p104 = scmp.ne.s32.totalorder %s99, %s101
      %p105 = scmp.eq.s32.totalorder %s19, 0
      %p106 = por %p104, %p105
      %p107 = scmp.ne.s32.totalorder %s99, %s101
      %p108 = scmp.eq.s32.totalorder %s24, 7
      %p109 = por %p107, %p108
      %p110 = scmp.ne.s32.totalorder %s101, %s102
      %p111 = scmp.eq.s32.totalorder %s24, 0
      %p112 = por %p110, %p111
      %p113 = scmp.ne.s32.totalorder %s101, %s102
      %p114 = scmp.eq.s32.totalorder %s25, 7
      %p115 = por %p113, %p114
      %p117 = scmp.ne.s32.totalorder %s102, %s116
      %p118 = scmp.eq.s32.totalorder %s25, 0
      %p119 = por %p117, %p118
      %s120 = smul.u32 %s27, 2
      %s121 = sadd.s32 %s120, %s28
      %s122 = smul.u32 %s41, 2
      %s123 = sadd.s32 %s122, %s37
      %s124 = ssub.s32 %s26, %s45
      %s125 = ssub.s32 %s121, %s123
      %s126 = sor.u32 %s124, %s125
      %p127 = scmp.eq.s32.totalorder %s126, 0
      %s129 = sadd.s32 %s128, 1
      %s130 = scalar_select %p127, %s128, %s129
      %p133 = pneg %p127
      %p134 = scmp.eq.s32.totalorder %s19, 7
      %p135 = por %p133, %p134
      %p136 = scmp.ne.s32.totalorder %s128, %s131
      %p137 = scmp.eq.s32.totalorder %s19, 0
      %p138 = por %p136, %p137
      %p139 = scmp.ne.s32.totalorder %s128, %s131
      %p140 = scmp.eq.s32.totalorder %s24, 7
      %p141 = por %p139, %p140
      %p142 = scmp.ne.s32.totalorder %s131, %s132
      %p143 = scmp.eq.s32.totalorder %s24, 0
      %p144 = por %p142, %p143
      %p145 = scmp.ne.s32.totalorder %s131, %s132
      %p146 = scmp.eq.s32.totalorder %s25, 7
      %p147 = por %p145, %p146
      %p149 = scmp.ne.s32.totalorder %s132, %s148
      %p150 = scmp.eq.s32.totalorder %s25, 0
      %p151 = por %p149, %p150
      %s152 = ssub.s32 %s26, %s45
      %s153 = ssub.s32 %s27, %s41
      %s154 = sor.u32 %s152, %s153
      %p155 = scmp.eq.s32.totalorder %s154, 0
      %s157 = sadd.s32 %s156, 1
      %s158 = scalar_select %p155, %s156, %s157
      %p161 = pneg %p155
      %p162 = scmp.eq.s32.totalorder %s19, 7
      %p163 = por %p161, %p162
      %p164 = scmp.ne.s32.totalorder %s156, %s159
      %p165 = scmp.eq.s32.totalorder %s19, 0
      %p166 = por %p164, %p165
      %p167 = scmp.ne.s32.totalorder %s156, %s159
      %p168 = scmp.eq.s32.totalorder %s24, 7
      %p169 = por %p167, %p168
      %p170 = scmp.ne.s32.totalorder %s159, %s160
      %p171 = scmp.eq.s32.totalorder %s24, 0
      %p172 = por %p170, %p171
      %p173 = scmp.ne.s32.totalorder %s159, %s160
      %p174 = scmp.eq.s32.totalorder %s25, 7
      %p175 = por %p173, %p174
      %p177 = scmp.ne.s32.totalorder %s160, %s176
      %p178 = scmp.eq.s32.totalorder %s25, 0
      %p179 = por %p177, %p178
      %s180 = ssub.s32 %s26, %s45
      %s181 = ssub.s32 %s27, %s41
      %s182 = sor.u32 %s180, %s181
      %p183 = scmp.eq.s32.totalorder %s182, 0
      %s185 = sadd.s32 %s184, 1
      %s186 = scalar_select %p183, %s184, %s185
      %p189 = pneg %p183
      %p190 = scmp.eq.s32.totalorder %s19, 7
      %p191 = por %p189, %p190
      %p192 = scmp.ne.s32.totalorder %s184, %s187
      %p193 = scmp.eq.s32.totalorder %s19, 0
      %p194 = por %p192, %p193
      %p195 = scmp.ne.s32.totalorder %s184, %s187
      %p196 = scmp.eq.s32.totalorder %s24, 7
      %p197 = por %p195, %p196
      %p198 = scmp.ne.s32.totalorder %s187, %s188
      %p199 = scmp.eq.s32.totalorder %s24, 0
      %p200 = por %p198, %p199
      %p201 = scmp.ne.s32.totalorder %s187, %s188
      %p202 = scmp.eq.s32.totalorder %s25, 7
      %p203 = por %p201, %p202
      %p205 = scmp.ne.s32.totalorder %s188, %s204
      %p206 = scmp.eq.s32.totalorder %s25, 0
      %p207 = por %p205, %p206
      %p208 = scmp.le.s32.totalorder 1, %s19
      %p209 = scmp.lt.s32.totalorder %s19, 9
      %p210 = pnand %p208, %p209
      %p211 = pneg %p210
      // Predicated region
      $region9: #{tpu_custom_call.1} parent=5 // pred_check
        _
      $region10: #{tpu_custom_call.1} parent=5 // pred_check_branch
        %213 = sbr.rel (%p210) target = $region12
      $region11: #{tpu_custom_call.1} parent=5 // pred_region
        %s214 = ssub.s32 %s19, 1
        // Predicated region
        $region13: #{tpu_custom_call.1} parent=11 // pred_check
          %p215 = pneg %p91
        $region14: #{tpu_custom_call.1} parent=11 // pred_check_branch
          %217 = sbr.rel (%p215) target = $region16
        $region15: #{tpu_custom_call.1} parent=11 // pred_region
          %s219 = ssub.s32 256, 256
          %220 = vsyncadd [#allocation6], %s219
          %s221 = sshll.u32 [#allocation5], 4
          %s222 = int_to_ptr.vmem [resolvable:$true] %s221
          %227 = dma.hbm_to_vmem [thread:$0]  %s1, 256, %s222, [#allocation6], 128, 128, 8
        $region16: #{tpu_custom_call.1} parent=11 // pred_fallthru
          _
        // Predicated region
        $region17: #{tpu_custom_call.1} parent=11 // pred_check
          %p228 = pneg %p112
        $region18: #{tpu_custom_call.1} parent=11 // pred_check_branch
          %230 = sbr.rel (%p228) target = $region20
        $region19: #{tpu_custom_call.1} parent=11 // pred_region
          _
        $region20: #{tpu_custom_call.1} parent=11 // pred_fallthru
          _
      $region12: #{tpu_custom_call.1} parent=5 // pred_fallthru
        _
      %p231 = scmp.lt.s32.totalorder %s19, 8
      // Predicated region
      $region21: #{tpu_custom_call.1} parent=5 // pred_check
        %p232 = pneg %p231
      $region22: #{tpu_custom_call.1} parent=5 // pred_check_branch
        %234 = sbr.rel (%p232) target = $region24
      $region23: #{tpu_custom_call.1} parent=5 // pred_region
        // Predicated region
        $region25: #{tpu_custom_call.1} parent=23 // pred_check
          %p235 = pneg %p64
        $region26: #{tpu_custom_call.1} parent=23 // pred_check_branch
          %237 = sbr.rel (%p235) target = $region28
        $region27: #{tpu_custom_call.1} parent=23 // pred_region
          %s238 = sand.u32 %s54, 1
          %s239 = scalar_lea.sflag [#allocation3], %s238
          %s240 = sand.u32 %s54, 1
          %s241 = smul.addr %s240, 24
          %s242 = scalar_lea.vmem [#allocation2], %s241
          %s243 = smul.u32 %s27, 2
          %s244 = sadd.s32 %s243, %s28
          %s246 = ssub.s32 384, 384
          %247 = vsyncadd %s239, %s246
          %s248 = smul.addr %s26, 12
          %s249 = sadd.s32 %s244, %s248
          %s250 = smul.addr %s249, 128
          %s251 = scalar_lea.hbm %s0, %s250
          %s252 = sshll.u32 %s242, 4
          %s253 = int_to_ptr.vmem [resolvable:$true] %s252
          %258 = dma.hbm_to_vmem [thread:$0]  %s251, 384, %s253, %s239, 512, 128, 8
        $region28: #{tpu_custom_call.1} parent=23 // pred_fallthru
          _
      $region24: #{tpu_custom_call.1} parent=5 // pred_fallthru
        _
      %p259 = scmp.le.s32.totalorder 1, %s19
      %p260 = scmp.lt.s32.totalorder %s19, 9
      %p261 = pnand %p259, %p260
      %p262 = pneg %p261
      // Predicated region
      $region29: #{tpu_custom_call.1} parent=5 // pred_check
        _
      $region30: #{tpu_custom_call.1} parent=5 // pred_check_branch
        %264 = sbr.rel (%p261) target = $region32
      $region31: #{tpu_custom_call.1} parent=5 // pred_region
        %s265 = ssub.s32 %s19, 1
        %s266 = sand.u32 %s57, 1
        %s267 = scalar_lea.sflag [#allocation3], %s266
        %s268 = sand.u32 %s57, 1
        %s269 = smul.addr %s268, 24
        %s270 = scalar_lea.vmem [#allocation2], %s269
        // Predicated region
        $region33: #{tpu_custom_call.1} parent=31 // pred_check
          %p271 = pneg %p70
        $region34: #{tpu_custom_call.1} parent=31 // pred_check_branch
          %273 = sbr.rel (%p271) target = $region36
        $region35: #{tpu_custom_call.1} parent=31 // pred_region
          %274 = dma.done %s267, 384
        $region36: #{tpu_custom_call.1} parent=31 // pred_fallthru
          _
        // Predicated region
        $region37: #{tpu_custom_call.1} parent=31 // pred_check
          %p275 = pneg %p91
        $region38: #{tpu_custom_call.1} parent=31 // pred_check_branch
          %277 = sbr.rel (%p275) target = $region40
        $region39: #{tpu_custom_call.1} parent=31 // pred_region
          %278 = dma.done [#allocation6], 256
        $region40: #{tpu_custom_call.1} parent=31 // pred_fallthru
          _
        %s279 = sand.u32 %s57, 1
        %s280 = scalar_lea.sflag [#allocation3], %s279
        %s281 = sand.u32 %s57, 1
        %s282 = smul.addr %s281, 24
        %s283 = scalar_lea.vmem [#allocation2], %s282
        %p284 = pneg %p70
        %p285 = pneg %p67
        %p286 = pneg %p91
        %p287 = pneg %p88
        %p288 = pneg %p112
        %p289 = pneg %p109
        %p290 = pneg %p144
        %p291 = pneg %p141
        %s292 = sand.u32 %s131, 1
        %s293 = scalar_lea.sflag [#allocation4], %s292
        %s294 = sand.u32 %s131, 1
        %s295 = smul.addr %s294, 16
        %s296 = scalar_lea.vmem [#allocation7], %s295
        %p297 = pneg %p172
        %p298 = pneg %p169
        %p299 = scmp.lt.s32.totalorder %s29, 1
        %s300 = scalar_select %p299, %s29, 1
        %p301 = scmp.lt.s32.totalorder %s30, 1
        %s302 = scalar_select %p301, %s30, 1
        %s303 = smul.addr %s302, 2
        %s304 = smul.addr %s300, 4
        %s305 = sadd.s32 %s303, %s304
        %s306 = smul.addr %s305, 8
        %s307 = scalar_lea.vmem %s4, %s306
        %p308 = pneg %p200
        %p309 = pneg %p197
        %p310 = scmp.lt.s32.totalorder %s29, 1
        %s311 = scalar_select %p310, %s29, 1
        %p312 = scmp.lt.s32.totalorder %s30, 1
        %s313 = scalar_select %p312, %s30, 1
        %s314 = smul.addr %s313, 2
        %s315 = smul.addr %s311, 4
        %s316 = sadd.s32 %s314, %s315
        %s317 = smul.addr %s316, 8
        %s318 = scalar_lea.vmem %s5, %s317
        %s319 = smul.u32 %s30, 2
        %s320 = sadd.s32 %s319, %s31
        %s321 = smul.u32 %s30, 2
        %s322 = sadd.s32 %s321, %s31
        %p323 = scmp.lt.s32.totalorder %s29, 1
        %s324 = scalar_select %p323, %s29, 1
        %p325 = scmp.lt.s32.totalorder %s30, 1
        %s326 = scalar_select %p325, %s30, 1
        %s327 = smul.addr %s326, 2
        %s328 = smul.addr %s324, 4
        %s329 = sadd.s32 %s327, %s328
        %s330 = smul.addr %s329, 8
        %s331 = scalar_lea.vmem %s4, %s330
        %p332 = scmp.lt.s32.totalorder %s29, 1
        %s333 = scalar_select %p332, %s29, 1
        %p334 = scmp.lt.s32.totalorder %s30, 1
        %s335 = scalar_select %p334, %s30, 1
        %s336 = smul.addr %s335, 2
        %s337 = smul.addr %s333, 4
        %s338 = sadd.s32 %s336, %s337
        %s339 = smul.addr %s338, 8
        %s340 = scalar_lea.vmem %s5, %s339
        %v341 = vld [vmem:[%s270] sm:$0xff]
        %v342 = vld [vmem:[%s270 + $0x8] sm:$0xff]
        %v343 = vld [vmem:[%s270 + $0x10] sm:$0xff]
        %v344 = vld [vmem:[#allocation5] sm:$0xff]
        %v345 = vld [vmem:[#allocation5 + $0x8] sm:$0xf]
        %v346 = vld [vmem:[%s2] sm:$0x1]
        %347 = vrot.lane.b32.xlu0 %v341, 127
        %v348 = vpop.permute.xlu0 %347
        %349 = vrot.lane.b32.xlu0 %v342, 127
        %v350 = vpop.permute.xlu0 %349
        %353 = vrot.lane.b32.xlu0 %v344, 104
        %v354 = vpop.permute.xlu0 %353
        %355 = vrot.lane.b32.xlu0 %v345, 104
        %v356 = vpop.permute.xlu0 %355
        %vm357 = vcmask 97280
        %v358 = vsel %vm357, %v354, 0
        %v360 = vsel %vm357, %v356, 0
        %vm362 = vcmask 1043456
        %v364 = vsel %vm362, %v350, 0
        %366 = vmatprep.subr.mxu0 0.0
        %367 = vmatpush1.msra.mxu0 0.0
        %368 = vmatprep.subr.mxu0 0.0
        %369 = vmatpush1.msra.mxu0 0.0
        %370 = vmatprep.subr.mxu0 0.0
        %371 = vmatpush1.msra.mxu0 0.0
        %372 = vmatprep.subr.mxu0 0.0
        %373 = vmatpush1.msra.mxu0 0.0
        %374 = vmatprep.subr.mxu0 0.0
        %375 = vmatpush1.msra.mxu0 0.0
        %376 = vmatprep.subr.mxu0 0.0
        %377 = vmatpush1.msra.mxu0 0.0
        %378 = vmatprep.subr.mxu0 0.0
        %379 = vmatpush1.msra.mxu0 0.0
        %380 = vmatprep.subr.mxu0 0.0
        %381 = vmatpush1.msra.mxu0 0.0
        %382 = vmatprep.subr.mxu0 0.0
        %383 = vmatpush1.msra.mxu0 0.0
        %384 = vmatprep.subr.mxu0 0.0
        %385 = vmatpush1.msra.mxu0 0.0
        %386 = vmatprep.subr.mxu0 0.0
        %387 = vmatpush1.msra.mxu0 0.0
        %388 = vmatprep.subr.mxu0 0.0
        %389 = vmatpush1.msra.mxu0 0.0
        %390 = vmatprep.subr.mxu0 0.0
        %391 = vmatpush1.msra.mxu0 0.0
        %392 = vmatprep.subr.mxu0 0.0
        %393 = vmatpush1.msra.mxu0 0.0
        %394 = vmatprep.subr.mxu0 0.0
        %v395 = vand.u32 %v364, 4294901760
        %396 = vmatpush1.msra.mxu0 %v395
        %397 = vmatprep.subr.mxu0 0.0
        %v398 = vand.u32 %v348, 4294901760
        %399 = vmatpush1.msra.mxu0 %v398
        %400 = vmatprep.subr.mxu0 0.0
        %401 = vmatpush2.msra.mxu0 0.0
        %402 = vmatprep.subr.mxu0 0.0
        %403 = vmatpush2.msra.mxu0 0.0
        %404 = vmatprep.subr.mxu0 0.0
        %405 = vmatpush2.msra.mxu0 0.0
        %406 = vmatprep.subr.mxu0 0.0
        %407 = vmatpush2.msra.mxu0 0.0
        %408 = vmatprep.subr.mxu0 0.0
        %409 = vmatpush2.msra.mxu0 0.0
        %410 = vmatprep.subr.mxu0 0.0
        %411 = vmatpush2.msra.mxu0 0.0
        %412 = vmatprep.subr.mxu0 0.0
        %413 = vmatpush2.msra.mxu0 0.0
        %414 = vmatprep.subr.mxu0 0.0
        %415 = vmatpush2.msra.mxu0 0.0
        %416 = vmatprep.subr.mxu0 0.0
        %417 = vmatpush2.msra.mxu0 0.0
        %418 = vmatprep.subr.mxu0 0.0
        %419 = vmatpush2.msra.mxu0 0.0
        %420 = vmatprep.subr.mxu0 0.0
        %421 = vmatpush2.msra.mxu0 0.0
        %422 = vmatprep.subr.mxu0 0.0
        %423 = vmatpush2.msra.mxu0 0.0
        %424 = vmatprep.subr.mxu0 0.0
        %425 = vmatpush2.msra.mxu0 0.0
        %426 = vmatprep.subr.mxu0 0.0
        %427 = vmatpush2.msra.mxu0 0.0
        %428 = vmatprep.subr.mxu0 0.0
        %429 = vmatpush2.msra.mxu0 0.0
        %430 = vmatprep.subr.mxu0 0.0
        %431 = vmatpush2.msra.mxu0 0.0
        %432 = vmatprep.mubr.f32.mxu0 0.0
        %v433 = vand.u32 %v358, 4294901760
        %v434 = vsub.f32 %v358, %v433
        %v435 = vand.u32 %v434, 4294901760
        %v436 = vsub.f32 %v434, %v435
        %v437 = vand.u32 %v436, 4294901760
        %438 = vmatmul.mubr.f32.gmra.mxu0 %v437
        %v439 = vpop.f32.mrf.mxu0
        %v440 = vadd.f32 0.0, %v439
        %v441 = vpop.f32.mrf.mxu0
        %442 = vmatprep.mubr.f32.mxu0 0.0
        %v443 = vand.u32 %v360, 4294901760
        %v444 = vsub.f32 %v360, %v443
        %v445 = vand.u32 %v444, 4294901760
        %v446 = vsub.f32 %v444, %v445
        %v447 = vand.u32 %v446, 4294901760
        %448 = vmatmul.mubr.f32.gmra.mxu0 %v447
        %v449 = vpop.f32.mrf.mxu0
        %v450 = vadd.f32 0.0, %v449
        %v451 = vpop.f32.mrf.mxu0
        %452 = vdwg.mxu0
        %453 = vmatprep.subr.mxu0 0.0
        %454 = vmatpush1.msra.mxu0 0.0
        %455 = vmatprep.subr.mxu0 0.0
        %456 = vmatpush1.msra.mxu0 0.0
        %457 = vmatprep.subr.mxu0 0.0
        %458 = vmatpush1.msra.mxu0 0.0
        %459 = vmatprep.subr.mxu0 0.0
        %460 = vmatpush1.msra.mxu0 0.0
        %461 = vmatprep.subr.mxu0 0.0
        %462 = vmatpush1.msra.mxu0 0.0
        %463 = vmatprep.subr.mxu0 0.0
        %464 = vmatpush1.msra.mxu0 0.0
        %465 = vmatprep.subr.mxu0 0.0
        %466 = vmatpush1.msra.mxu0 0.0
        %467 = vmatprep.subr.mxu0 0.0
        %468 = vmatpush1.msra.mxu0 0.0
        %469 = vmatprep.subr.mxu0 0.0
        %470 = vmatpush1.msra.mxu0 0.0
        %471 = vmatprep.subr.mxu0 0.0
        %472 = vmatpush1.msra.mxu0 0.0
        %473 = vmatprep.subr.mxu0 0.0
        %474 = vmatpush1.msra.mxu0 0.0
        %475 = vmatprep.subr.mxu0 0.0
        %476 = vmatpush1.msra.mxu0 0.0
        %477 = vmatprep.subr.mxu0 0.0
        %478 = vmatpush1.msra.mxu0 0.0
        %479 = vmatprep.subr.mxu0 0.0
        %480 = vmatpush1.msra.mxu0 0.0
        %481 = vmatprep.subr.mxu0 0.0
        %v482 = vand.u32 %v364, 4294901760
        %v483 = vsub.f32 %v364, %v482
        %v484 = vand.u32 %v483, 4294901760
        %v485 = vsub.f32 %v483, %v484
        %v486 = vand.u32 %v485, 4294901760
        %487 = vmatpush1.msra.mxu0 %v486
        %488 = vmatprep.subr.mxu0 0.0
        %v489 = vand.u32 %v348, 4294901760
        %v490 = vsub.f32 %v348, %v489
        %v491 = vand.u32 %v490, 4294901760
        %v492 = vsub.f32 %v490, %v491
        %v493 = vand.u32 %v492, 4294901760
        %494 = vmatpush1.msra.mxu0 %v493
        %495 = vmatprep.subr.mxu0 0.0
        %496 = vmatpush2.msra.mxu0 0.0
        %497 = vmatprep.subr.mxu0 0.0
        %498 = vmatpush2.msra.mxu0 0.0
        %499 = vmatprep.subr.mxu0 0.0
        %500 = vmatpush2.msra.mxu0 0.0
        %501 = vmatprep.subr.mxu0 0.0
        %502 = vmatpush2.msra.mxu0 0.0
        %503 = vmatprep.subr.mxu0 0.0
        %504 = vmatpush2.msra.mxu0 0.0
        %505 = vmatprep.subr.mxu0 0.0
        %506 = vmatpush2.msra.mxu0 0.0
        %507 = vmatprep.subr.mxu0 0.0
        %508 = vmatpush2.msra.mxu0 0.0
        %509 = vmatprep.subr.mxu0 0.0
        %510 = vmatpush2.msra.mxu0 0.0
        %511 = vmatprep.subr.mxu0 0.0
        %512 = vmatpush2.msra.mxu0 0.0
        %513 = vmatprep.subr.mxu0 0.0
        %514 = vmatpush2.msra.mxu0 0.0
        %515 = vmatprep.subr.mxu0 0.0
        %516 = vmatpush2.msra.mxu0 0.0
        %517 = vmatprep.subr.mxu0 0.0
        %518 = vmatpush2.msra.mxu0 0.0
        %519 = vmatprep.subr.mxu0 0.0
        %520 = vmatpush2.msra.mxu0 0.0
        %521 = vmatprep.subr.mxu0 0.0
        %522 = vmatpush2.msra.mxu0 0.0
        %523 = vmatprep.subr.mxu0 0.0
        %524 = vmatpush2.msra.mxu0 0.0
        %525 = vmatprep.subr.mxu0 0.0
        %526 = vmatpush2.msra.mxu0 0.0
        %527 = vmatprep.mubr.f32.mxu0 0.0
        %v528 = vand.u32 %v358, 4294901760
        %529 = vmatmul.mubr.f32.gmra.mxu0 %v528
        %v530 = vpop.f32.mrf.mxu0
        %v531 = vadd.f32 %v440, %v530
        %v532 = vpop.f32.mrf.mxu0
        %533 = vmatprep.mubr.f32.mxu0 0.0
        %v534 = vand.u32 %v360, 4294901760
        %535 = vmatmul.mubr.f32.gmra.mxu0 %v534
        %v536 = vpop.f32.mrf.mxu0
        %v537 = vadd.f32 %v450, %v536
        %v538 = vpop.f32.mrf.mxu0
        %539 = vdwg.mxu0
        %540 = vmatprep.subr.mxu0 0.0
        %541 = vmatpush1.msra.mxu0 0.0
        %542 = vmatprep.subr.mxu0 0.0
        %543 = vmatpush1.msra.mxu0 0.0
        %544 = vmatprep.subr.mxu0 0.0
        %545 = vmatpush1.msra.mxu0 0.0
        %546 = vmatprep.subr.mxu0 0.0
        %547 = vmatpush1.msra.mxu0 0.0
        %548 = vmatprep.subr.mxu0 0.0
        %549 = vmatpush1.msra.mxu0 0.0
        %550 = vmatprep.subr.mxu0 0.0
        %551 = vmatpush1.msra.mxu0 0.0
        %552 = vmatprep.subr.mxu0 0.0
        %553 = vmatpush1.msra.mxu0 0.0
        %554 = vmatprep.subr.mxu0 0.0
        %555 = vmatpush1.msra.mxu0 0.0
        %556 = vmatprep.subr.mxu0 0.0
        %557 = vmatpush1.msra.mxu0 0.0
        %558 = vmatprep.subr.mxu0 0.0
        %559 = vmatpush1.msra.mxu0 0.0
        %560 = vmatprep.subr.mxu0 0.0
        %561 = vmatpush1.msra.mxu0 0.0
        %562 = vmatprep.subr.mxu0 0.0
        %563 = vmatpush1.msra.mxu0 0.0
        %564 = vmatprep.subr.mxu0 0.0
        %565 = vmatpush1.msra.mxu0 0.0
        %566 = vmatprep.subr.mxu0 0.0
        %567 = vmatpush1.msra.mxu0 0.0
        %568 = vmatprep.subr.mxu0 0.0
        %v569 = vand.u32 %v364, 4294901760
        %v570 = vsub.f32 %v364, %v569
        %571 = vmatpush1.msra.mxu0 %v570
        %572 = vmatprep.subr.mxu0 0.0
        %v573 = vand.u32 %v348, 4294901760
        %v574 = vsub.f32 %v348, %v573
        %575 = vmatpush1.msra.mxu0 %v574
        %576 = vmatprep.subr.mxu0 0.0
        %577 = vmatpush2.msra.mxu0 0.0
        %578 = vmatprep.subr.mxu0 0.0
        %579 = vmatpush2.msra.mxu0 0.0
        %580 = vmatprep.subr.mxu0 0.0
        %581 = vmatpush2.msra.mxu0 0.0
        %582 = vmatprep.subr.mxu0 0.0
        %583 = vmatpush2.msra.mxu0 0.0
        %584 = vmatprep.subr.mxu0 0.0
        %585 = vmatpush2.msra.mxu0 0.0
        %586 = vmatprep.subr.mxu0 0.0
        %587 = vmatpush2.msra.mxu0 0.0
        %588 = vmatprep.subr.mxu0 0.0
        %589 = vmatpush2.msra.mxu0 0.0
        %590 = vmatprep.subr.mxu0 0.0
        %591 = vmatpush2.msra.mxu0 0.0
        %592 = vmatprep.subr.mxu0 0.0
        %593 = vmatpush2.msra.mxu0 0.0
        %594 = vmatprep.subr.mxu0 0.0
        %595 = vmatpush2.msra.mxu0 0.0
        %596 = vmatprep.subr.mxu0 0.0
        %597 = vmatpush2.msra.mxu0 0.0
        %598 = vmatprep.subr.mxu0 0.0
        %599 = vmatpush2.msra.mxu0 0.0
        %600 = vmatprep.subr.mxu0 0.0
        %601 = vmatpush2.msra.mxu0 0.0
        %602 = vmatprep.subr.mxu0 0.0
        %603 = vmatpush2.msra.mxu0 0.0
        %604 = vmatprep.subr.mxu0 0.0
        %605 = vmatpush2.msra.mxu0 0.0
        %606 = vmatprep.subr.mxu0 0.0
        %607 = vmatpush2.msra.mxu0 0.0
        %608 = vmatprep.mubr.f32.mxu0 0.0
        %v609 = vand.u32 %v358, 4294901760
        %v610 = vsub.f32 %v358, %v609
        %611 = vmatmul.mubr.f32.gmra.mxu0 %v610
        %v612 = vpop.f32.mrf.mxu0
        %v613 = vadd.f32 %v531, %v612
        %v614 = vpop.f32.mrf.mxu0
        %615 = vmatprep.mubr.f32.mxu0 0.0
        %v616 = vand.u32 %v360, 4294901760
        %v617 = vsub.f32 %v360, %v616
        %618 = vmatmul.mubr.f32.gmra.mxu0 %v617
        %v619 = vpop.f32.mrf.mxu0
        %v620 = vadd.f32 %v537, %v619
        %v621 = vpop.f32.mrf.mxu0
        %622 = vdwg.mxu0
        %623 = vmatprep.subr.mxu0 0.0
        %624 = vmatpush1.msra.mxu0 0.0
        %625 = vmatprep.subr.mxu0 0.0
        %626 = vmatpush1.msra.mxu0 0.0
        %627 = vmatprep.subr.mxu0 0.0
        %628 = vmatpush1.msra.mxu0 0.0
        %629 = vmatprep.subr.mxu0 0.0
        %630 = vmatpush1.msra.mxu0 0.0
        %631 = vmatprep.subr.mxu0 0.0
        %632 = vmatpush1.msra.mxu0 0.0
        %633 = vmatprep.subr.mxu0 0.0
        %634 = vmatpush1.msra.mxu0 0.0
        %635 = vmatprep.subr.mxu0 0.0
        %636 = vmatpush1.msra.mxu0 0.0
        %637 = vmatprep.subr.mxu0 0.0
        %638 = vmatpush1.msra.mxu0 0.0
        %639 = vmatprep.subr.mxu0 0.0
        %640 = vmatpush1.msra.mxu0 0.0
        %641 = vmatprep.subr.mxu0 0.0
        %642 = vmatpush1.msra.mxu0 0.0
        %643 = vmatprep.subr.mxu0 0.0
        %644 = vmatpush1.msra.mxu0 0.0
        %645 = vmatprep.subr.mxu0 0.0
        %646 = vmatpush1.msra.mxu0 0.0
        %647 = vmatprep.subr.mxu0 0.0
        %648 = vmatpush1.msra.mxu0 0.0
        %649 = vmatprep.subr.mxu0 0.0
        %650 = vmatpush1.msra.mxu0 0.0
        %651 = vmatprep.subr.mxu0 0.0
        %v652 = vand.u32 %v364, 4294901760
        %653 = vmatpush1.msra.mxu0 %v652
        %654 = vmatprep.subr.mxu0 0.0
        %v655 = vand.u32 %v348, 4294901760
        %656 = vmatpush1.msra.mxu0 %v655
        %657 = vmatprep.subr.mxu0 0.0
        %658 = vmatpush2.msra.mxu0 0.0
        %659 = vmatprep.subr.mxu0 0.0
        %660 = vmatpush2.msra.mxu0 0.0
        %661 = vmatprep.subr.mxu0 0.0
        %662 = vmatpush2.msra.mxu0 0.0
        %663 = vmatprep.subr.mxu0 0.0
        %664 = vmatpush2.msra.mxu0 0.0
        %665 = vmatprep.subr.mxu0 0.0
        %666 = vmatpush2.msra.mxu0 0.0
        %667 = vmatprep.subr.mxu0 0.0
        %668 = vmatpush2.msra.mxu0 0.0
        %669 = vmatprep.subr.mxu0 0.0
        %670 = vmatpush2.msra.mxu0 0.0
        %671 = vmatprep.subr.mxu0 0.0
        %672 = vmatpush2.msra.mxu0 0.0
        %673 = vmatprep.subr.mxu0 0.0
        %674 = vmatpush2.msra.mxu0 0.0
        %675 = vmatprep.subr.mxu0 0.0
        %676 = vmatpush2.msra.mxu0 0.0
        %677 = vmatprep.subr.mxu0 0.0
        %678 = vmatpush2.msra.mxu0 0.0
        %679 = vmatprep.subr.mxu0 0.0
        %680 = vmatpush2.msra.mxu0 0.0
        %681 = vmatprep.subr.mxu0 0.0
        %682 = vmatpush2.msra.mxu0 0.0
        %683 = vmatprep.subr.mxu0 0.0
        %684 = vmatpush2.msra.mxu0 0.0
        %685 = vmatprep.subr.mxu0 0.0
        %686 = vmatpush2.msra.mxu0 0.0
        %687 = vmatprep.subr.mxu0 0.0
        %688 = vmatpush2.msra.mxu0 0.0
        %689 = vmatprep.mubr.f32.mxu0 0.0
        %v690 = vand.u32 %v358, 4294901760
        %v691 = vsub.f32 %v358, %v690
        %v692 = vand.u32 %v691, 4294901760
        %693 = vmatmul.mubr.f32.gmra.mxu0 %v692
        %v694 = vpop.f32.mrf.mxu0
        %v695 = vadd.f32 %v613, %v694
        %v696 = vpop.f32.mrf.mxu0
        %697 = vmatprep.mubr.f32.mxu0 0.0
        %v698 = vand.u32 %v360, 4294901760
        %v699 = vsub.f32 %v360, %v698
        %v700 = vand.u32 %v699, 4294901760
        %701 = vmatmul.mubr.f32.gmra.mxu0 %v700
        %v702 = vpop.f32.mrf.mxu0
        %v703 = vadd.f32 %v620, %v702
        %v704 = vpop.f32.mrf.mxu0
        %705 = vdwg.mxu0
        %706 = vmatprep.subr.mxu0 0.0
        %707 = vmatpush1.msra.mxu0 0.0
        %708 = vmatprep.subr.mxu0 0.0
        %709 = vmatpush1.msra.mxu0 0.0
        %710 = vmatprep.subr.mxu0 0.0
        %711 = vmatpush1.msra.mxu0 0.0
        %712 = vmatprep.subr.mxu0 0.0
        %713 = vmatpush1.msra.mxu0 0.0
        %714 = vmatprep.subr.mxu0 0.0
        %715 = vmatpush1.msra.mxu0 0.0
        %716 = vmatprep.subr.mxu0 0.0
        %717 = vmatpush1.msra.mxu0 0.0
        %718 = vmatprep.subr.mxu0 0.0
        %719 = vmatpush1.msra.mxu0 0.0
        %720 = vmatprep.subr.mxu0 0.0
        %721 = vmatpush1.msra.mxu0 0.0
        %722 = vmatprep.subr.mxu0 0.0
        %723 = vmatpush1.msra.mxu0 0.0
        %724 = vmatprep.subr.mxu0 0.0
        %725 = vmatpush1.msra.mxu0 0.0
        %726 = vmatprep.subr.mxu0 0.0
        %727 = vmatpush1.msra.mxu0 0.0
        %728 = vmatprep.subr.mxu0 0.0
        %729 = vmatpush1.msra.mxu0 0.0
        %730 = vmatprep.subr.mxu0 0.0
        %731 = vmatpush1.msra.mxu0 0.0
        %732 = vmatprep.subr.mxu0 0.0
        %733 = vmatpush1.msra.mxu0 0.0
        %734 = vmatprep.subr.mxu0 0.0
        %v735 = vand.u32 %v364, 4294901760
        %v736 = vsub.f32 %v364, %v735
        %v737 = vand.u32 %v736, 4294901760
        %738 = vmatpush1.msra.mxu0 %v737
        %739 = vmatprep.subr.mxu0 0.0
        %v740 = vand.u32 %v348, 4294901760
        %v741 = vsub.f32 %v348, %v740
        %v742 = vand.u32 %v741, 4294901760
        %743 = vmatpush1.msra.mxu0 %v742
        %744 = vmatprep.subr.mxu0 0.0
        %745 = vmatpush2.msra.mxu0 0.0
        %746 = vmatprep.subr.mxu0 0.0
        %747 = vmatpush2.msra.mxu0 0.0
        %748 = vmatprep.subr.mxu0 0.0
        %749 = vmatpush2.msra.mxu0 0.0
        %750 = vmatprep.subr.mxu0 0.0
        %751 = vmatpush2.msra.mxu0 0.0
        %752 = vmatprep.subr.mxu0 0.0
        %753 = vmatpush2.msra.mxu0 0.0
        %754 = vmatprep.subr.mxu0 0.0
        %755 = vmatpush2.msra.mxu0 0.0
        %756 = vmatprep.subr.mxu0 0.0
        %757 = vmatpush2.msra.mxu0 0.0
        %758 = vmatprep.subr.mxu0 0.0
        %759 = vmatpush2.msra.mxu0 0.0
        %760 = vmatprep.subr.mxu0 0.0
        %761 = vmatpush2.msra.mxu0 0.0
        %762 = vmatprep.subr.mxu0 0.0
        %763 = vmatpush2.msra.mxu0 0.0
        %764 = vmatprep.subr.mxu0 0.0
        %765 = vmatpush2.msra.mxu0 0.0
        %766 = vmatprep.subr.mxu0 0.0
        %767 = vmatpush2.msra.mxu0 0.0
        %768 = vmatprep.subr.mxu0 0.0
        %769 = vmatpush2.msra.mxu0 0.0
        %770 = vmatprep.subr.mxu0 0.0
        %771 = vmatpush2.msra.mxu0 0.0
        %772 = vmatprep.subr.mxu0 0.0
        %773 = vmatpush2.msra.mxu0 0.0
        %774 = vmatprep.subr.mxu0 0.0
        %775 = vmatpush2.msra.mxu0 0.0
        %776 = vmatprep.mubr.f32.mxu0 0.0
        %v777 = vand.u32 %v358, 4294901760
        %778 = vmatmul.mubr.f32.gmra.mxu0 %v777
        %v779 = vpop.f32.mrf.mxu0
        %v780 = vadd.f32 %v695, %v779
        %v781 = vpop.f32.mrf.mxu0
        %782 = vmatprep.mubr.f32.mxu0 0.0
        %v783 = vand.u32 %v360, 4294901760
        %784 = vmatmul.mubr.f32.gmra.mxu0 %v783
        %v785 = vpop.f32.mrf.mxu0
        %v786 = vadd.f32 %v703, %v785
        %v787 = vpop.f32.mrf.mxu0
        %788 = vdwg.mxu0
        %789 = vmatprep.subr.mxu0 0.0
        %790 = vmatpush1.msra.mxu0 0.0
        %791 = vmatprep.subr.mxu0 0.0
        %792 = vmatpush1.msra.mxu0 0.0
        %793 = vmatprep.subr.mxu0 0.0
        %794 = vmatpush1.msra.mxu0 0.0
        %795 = vmatprep.subr.mxu0 0.0
        %796 = vmatpush1.msra.mxu0 0.0
        %797 = vmatprep.subr.mxu0 0.0
        %798 = vmatpush1.msra.mxu0 0.0
        %799 = vmatprep.subr.mxu0 0.0
        %800 = vmatpush1.msra.mxu0 0.0
        %801 = vmatprep.subr.mxu0 0.0
        %802 = vmatpush1.msra.mxu0 0.0
        %803 = vmatprep.subr.mxu0 0.0
        %804 = vmatpush1.msra.mxu0 0.0
        %805 = vmatprep.subr.mxu0 0.0
        %806 = vmatpush1.msra.mxu0 0.0
        %807 = vmatprep.subr.mxu0 0.0
        %808 = vmatpush1.msra.mxu0 0.0
        %809 = vmatprep.subr.mxu0 0.0
        %810 = vmatpush1.msra.mxu0 0.0
        %811 = vmatprep.subr.mxu0 0.0
        %812 = vmatpush1.msra.mxu0 0.0
        %813 = vmatprep.subr.mxu0 0.0
        %814 = vmatpush1.msra.mxu0 0.0
        %815 = vmatprep.subr.mxu0 0.0
        %816 = vmatpush1.msra.mxu0 0.0
        %817 = vmatprep.subr.mxu0 0.0
        %v818 = vand.u32 %v364, 4294901760
        %819 = vmatpush1.msra.mxu0 %v818
        %820 = vmatprep.subr.mxu0 0.0
        %v821 = vand.u32 %v348, 4294901760
        %822 = vmatpush1.msra.mxu0 %v821
        %823 = vmatprep.subr.mxu0 0.0
        %824 = vmatpush2.msra.mxu0 0.0
        %825 = vmatprep.subr.mxu0 0.0
        %826 = vmatpush2.msra.mxu0 0.0
        %827 = vmatprep.subr.mxu0 0.0
        %828 = vmatpush2.msra.mxu0 0.0
        %829 = vmatprep.subr.mxu0 0.0
        %830 = vmatpush2.msra.mxu0 0.0
        %831 = vmatprep.subr.mxu0 0.0
        %832 = vmatpush2.msra.mxu0 0.0
        %833 = vmatprep.subr.mxu0 0.0
        %834 = vmatpush2.msra.mxu0 0.0
        %835 = vmatprep.subr.mxu0 0.0
        %836 = vmatpush2.msra.mxu0 0.0
        %837 = vmatprep.subr.mxu0 0.0
        %838 = vmatpush2.msra.mxu0 0.0
        %839 = vmatprep.subr.mxu0 0.0
        %840 = vmatpush2.msra.mxu0 0.0
        %841 = vmatprep.subr.mxu0 0.0
        %842 = vmatpush2.msra.mxu0 0.0
        %843 = vmatprep.subr.mxu0 0.0
        %844 = vmatpush2.msra.mxu0 0.0
        %845 = vmatprep.subr.mxu0 0.0
        %846 = vmatpush2.msra.mxu0 0.0
        %847 = vmatprep.subr.mxu0 0.0
        %848 = vmatpush2.msra.mxu0 0.0
        %849 = vmatprep.subr.mxu0 0.0
        %850 = vmatpush2.msra.mxu0 0.0
        %851 = vmatprep.subr.mxu0 0.0
        %852 = vmatpush2.msra.mxu0 0.0
        %853 = vmatprep.subr.mxu0 0.0
        %854 = vmatpush2.msra.mxu0 0.0
        %855 = vmatprep.mubr.f32.mxu0 0.0
        %v856 = vand.u32 %v358, 4294901760
        %857 = vmatmul.mubr.f32.gmra.mxu0 %v856
        %v858 = vpop.f32.mrf.mxu0
        %v859 = vadd.f32 %v780, %v858
        %v860 = vpop.f32.mrf.mxu0
        %861 = vmatprep.mubr.f32.mxu0 0.0
        %v862 = vand.u32 %v360, 4294901760
        %863 = vmatmul.mubr.f32.gmra.mxu0 %v862
        %v864 = vpop.f32.mrf.mxu0
        %v865 = vadd.f32 %v786, %v864
        %v866 = vpop.f32.mrf.mxu0
        %867 = vdwg.mxu0
        %vm868 = vcmask 195584
        %v869 = vsel %vm868, %v344, 0
        %v871 = vsel %vm868, %v345, 0
        %873 = vmatprep.subr.mxu0 0.0
        %874 = vmatpush1.msra.mxu0 0.0
        %875 = vmatprep.subr.mxu0 0.0
        %876 = vmatpush1.msra.mxu0 0.0
        %877 = vmatprep.subr.mxu0 0.0
        %878 = vmatpush1.msra.mxu0 0.0
        %879 = vmatprep.subr.mxu0 0.0
        %880 = vmatpush1.msra.mxu0 0.0
        %881 = vmatprep.subr.mxu0 0.0
        %882 = vmatpush1.msra.mxu0 0.0
        %883 = vmatprep.subr.mxu0 0.0
        %884 = vmatpush1.msra.mxu0 0.0
        %885 = vmatprep.subr.mxu0 0.0
        %886 = vmatpush1.msra.mxu0 0.0
        %887 = vmatprep.subr.mxu0 0.0
        %888 = vmatpush1.msra.mxu0 0.0
        %889 = vmatprep.subr.mxu0 0.0
        %890 = vmatpush1.msra.mxu0 0.0
        %891 = vmatprep.subr.mxu0 0.0
        %892 = vmatpush1.msra.mxu0 0.0
        %893 = vmatprep.subr.mxu0 0.0
        %894 = vmatpush1.msra.mxu0 0.0
        %895 = vmatprep.subr.mxu0 0.0
        %896 = vmatpush1.msra.mxu0 0.0
        %897 = vmatprep.subr.mxu0 0.0
        %898 = vmatpush1.msra.mxu0 0.0
        %899 = vmatprep.subr.mxu0 0.0
        %v900 = vand.u32 %v343, 4294901760
        %901 = vmatpush1.msra.mxu0 %v900
        %902 = vmatprep.subr.mxu0 0.0
        %v903 = vand.u32 %v342, 4294901760
        %904 = vmatpush1.msra.mxu0 %v903
        %905 = vmatprep.subr.mxu0 0.0
        %v906 = vand.u32 %v341, 4294901760
        %907 = vmatpush1.msra.mxu0 %v906
        %908 = vmatprep.subr.mxu0 0.0
        %909 = vmatpush2.msra.mxu0 0.0
        %910 = vmatprep.subr.mxu0 0.0
        %911 = vmatpush2.msra.mxu0 0.0
        %912 = vmatprep.subr.mxu0 0.0
        %913 = vmatpush2.msra.mxu0 0.0
        %914 = vmatprep.subr.mxu0 0.0
        %915 = vmatpush2.msra.mxu0 0.0
        %916 = vmatprep.subr.mxu0 0.0
        %917 = vmatpush2.msra.mxu0 0.0
        %918 = vmatprep.subr.mxu0 0.0
        %919 = vmatpush2.msra.mxu0 0.0
        %920 = vmatprep.subr.mxu0 0.0
        %921 = vmatpush2.msra.mxu0 0.0
        %922 = vmatprep.subr.mxu0 0.0
        %923 = vmatpush2.msra.mxu0 0.0
        %924 = vmatprep.subr.mxu0 0.0
        %925 = vmatpush2.msra.mxu0 0.0
        %926 = vmatprep.subr.mxu0 0.0
        %927 = vmatpush2.msra.mxu0 0.0
        %928 = vmatprep.subr.mxu0 0.0
        %929 = vmatpush2.msra.mxu0 0.0
        %930 = vmatprep.subr.mxu0 0.0
        %931 = vmatpush2.msra.mxu0 0.0
        %932 = vmatprep.subr.mxu0 0.0
        %933 = vmatpush2.msra.mxu0 0.0
        %934 = vmatprep.subr.mxu0 0.0
        %935 = vmatpush2.msra.mxu0 0.0
        %936 = vmatprep.subr.mxu0 0.0
        %937 = vmatpush2.msra.mxu0 0.0
        %938 = vmatprep.subr.mxu0 0.0
        %939 = vmatpush2.msra.mxu0 0.0
        %940 = vmatprep.mubr.f32.mxu0 0.0
        %v941 = vand.u32 %v869, 4294901760
        %v942 = vsub.f32 %v869, %v941
        %v943 = vand.u32 %v942, 4294901760
        %v944 = vsub.f32 %v942, %v943
        %v945 = vand.u32 %v944, 4294901760
        %946 = vmatmul.mubr.f32.gmra.mxu0 %v945
        %v947 = vpop.f32.mrf.mxu0
        %v948 = vadd.f32 %v859, %v947
        %v949 = vpop.f32.mrf.mxu0
        %950 = vmatprep.mubr.f32.mxu0 0.0
        %v951 = vand.u32 %v871, 4294901760
        %v952 = vsub.f32 %v871, %v951
        %v953 = vand.u32 %v952, 4294901760
        %v954 = vsub.f32 %v952, %v953
        %v955 = vand.u32 %v954, 4294901760
        %956 = vmatmul.mubr.f32.gmra.mxu0 %v955
        %v957 = vpop.f32.mrf.mxu0
        %v958 = vadd.f32 %v865, %v957
        %v959 = vpop.f32.mrf.mxu0
        %960 = vdwg.mxu0
        %961 = vmatprep.subr.mxu0 0.0
        %962 = vmatpush1.msra.mxu0 0.0
        %963 = vmatprep.subr.mxu0 0.0
        %964 = vmatpush1.msra.mxu0 0.0
        %965 = vmatprep.subr.mxu0 0.0
        %966 = vmatpush1.msra.mxu0 0.0
        %967 = vmatprep.subr.mxu0 0.0
        %968 = vmatpush1.msra.mxu0 0.0
        %969 = vmatprep.subr.mxu0 0.0
        %970 = vmatpush1.msra.mxu0 0.0
        %971 = vmatprep.subr.mxu0 0.0
        %972 = vmatpush1.msra.mxu0 0.0
        %973 = vmatprep.subr.mxu0 0.0
        %974 = vmatpush1.msra.mxu0 0.0
        %975 = vmatprep.subr.mxu0 0.0
        %976 = vmatpush1.msra.mxu0 0.0
        %977 = vmatprep.subr.mxu0 0.0
        %978 = vmatpush1.msra.mxu0 0.0
        %979 = vmatprep.subr.mxu0 0.0
        %980 = vmatpush1.msra.mxu0 0.0
        %981 = vmatprep.subr.mxu0 0.0
        %982 = vmatpush1.msra.mxu0 0.0
        %983 = vmatprep.subr.mxu0 0.0
        %984 = vmatpush1.msra.mxu0 0.0
        %985 = vmatprep.subr.mxu0 0.0
        %986 = vmatpush1.msra.mxu0 0.0
        %987 = vmatprep.subr.mxu0 0.0
        %v988 = vand.u32 %v343, 4294901760
        %v989 = vsub.f32 %v343, %v988
        %v990 = vand.u32 %v989, 4294901760
        %v991 = vsub.f32 %v989, %v990
        %v992 = vand.u32 %v991, 4294901760
        %993 = vmatpush1.msra.mxu0 %v992
        %994 = vmatprep.subr.mxu0 0.0
        %v995 = vand.u32 %v342, 4294901760
        %v996 = vsub.f32 %v342, %v995
        %v997 = vand.u32 %v996, 4294901760
        %v998 = vsub.f32 %v996, %v997
        %v999 = vand.u32 %v998, 4294901760
        %1000 = vmatpush1.msra.mxu0 %v999
        %1001 = vmatprep.subr.mxu0 0.0
        %v1002 = vand.u32 %v341, 4294901760
        %v1003 = vsub.f32 %v341, %v1002
        %v1004 = vand.u32 %v1003, 4294901760
        %v1005 = vsub.f32 %v1003, %v1004
        %v1006 = vand.u32 %v1005, 4294901760
        %1007 = vmatpush1.msra.mxu0 %v1006
        %1008 = vmatprep.subr.mxu0 0.0
        %1009 = vmatpush2.msra.mxu0 0.0
        %1010 = vmatprep.subr.mxu0 0.0
        %1011 = vmatpush2.msra.mxu0 0.0
        %1012 = vmatprep.subr.mxu0 0.0
        %1013 = vmatpush2.msra.mxu0 0.0
        %1014 = vmatprep.subr.mxu0 0.0
        %1015 = vmatpush2.msra.mxu0 0.0
        %1016 = vmatprep.subr.mxu0 0.0
        %1017 = vmatpush2.msra.mxu0 0.0
        %1018 = vmatprep.subr.mxu0 0.0
        %1019 = vmatpush2.msra.mxu0 0.0
        %1020 = vmatprep.subr.mxu0 0.0
        %1021 = vmatpush2.msra.mxu0 0.0
        %1022 = vmatprep.subr.mxu0 0.0
        %1023 = vmatpush2.msra.mxu0 0.0
        %1024 = vmatprep.subr.mxu0 0.0
        %1025 = vmatpush2.msra.mxu0 0.0
        %1026 = vmatprep.subr.mxu0 0.0
        %1027 = vmatpush2.msra.mxu0 0.0
        %1028 = vmatprep.subr.mxu0 0.0
        %1029 = vmatpush2.msra.mxu0 0.0
        %1030 = vmatprep.subr.mxu0 0.0
        %1031 = vmatpush2.msra.mxu0 0.0
        %1032 = vmatprep.subr.mxu0 0.0
        %1033 = vmatpush2.msra.mxu0 0.0
        %1034 = vmatprep.subr.mxu0 0.0
        %1035 = vmatpush2.msra.mxu0 0.0
        %1036 = vmatprep.subr.mxu0 0.0
        %1037 = vmatpush2.msra.mxu0 0.0
        %1038 = vmatprep.subr.mxu0 0.0
        %1039 = vmatpush2.msra.mxu0 0.0
        %1040 = vmatprep.mubr.f32.mxu0 0.0
        %v1041 = vand.u32 %v869, 4294901760
        %1042 = vmatmul.mubr.f32.gmra.mxu0 %v1041
        %v1043 = vpop.f32.mrf.mxu0
        %v1044 = vadd.f32 %v948, %v1043
        %v1045 = vpop.f32.mrf.mxu0
        %1046 = vmatprep.mubr.f32.mxu0 0.0
        %v1047 = vand.u32 %v871, 4294901760
        %1048 = vmatmul.mubr.f32.gmra.mxu0 %v1047
        %v1049 = vpop.f32.mrf.mxu0
        %v1050 = vadd.f32 %v958, %v1049
        %v1051 = vpop.f32.mrf.mxu0
        %1052 = vdwg.mxu0
        %1053 = vmatprep.subr.mxu0 0.0
        %1054 = vmatpush1.msra.mxu0 0.0
        %1055 = vmatprep.subr.mxu0 0.0
        %1056 = vmatpush1.msra.mxu0 0.0
        %1057 = vmatprep.subr.mxu0 0.0
        %1058 = vmatpush1.msra.mxu0 0.0
        %1059 = vmatprep.subr.mxu0 0.0
        %1060 = vmatpush1.msra.mxu0 0.0
        %1061 = vmatprep.subr.mxu0 0.0
        %1062 = vmatpush1.msra.mxu0 0.0
        %1063 = vmatprep.subr.mxu0 0.0
        %1064 = vmatpush1.msra.mxu0 0.0
        %1065 = vmatprep.subr.mxu0 0.0
        %1066 = vmatpush1.msra.mxu0 0.0
        %1067 = vmatprep.subr.mxu0 0.0
        %1068 = vmatpush1.msra.mxu0 0.0
        %1069 = vmatprep.subr.mxu0 0.0
        %1070 = vmatpush1.msra.mxu0 0.0
        %1071 = vmatprep.subr.mxu0 0.0
        %1072 = vmatpush1.msra.mxu0 0.0
        %1073 = vmatprep.subr.mxu0 0.0
        %1074 = vmatpush1.msra.mxu0 0.0
        %1075 = vmatprep.subr.mxu0 0.0
        %1076 = vmatpush1.msra.mxu0 0.0
        %1077 = vmatprep.subr.mxu0 0.0
        %1078 = vmatpush1.msra.mxu0 0.0
        %1079 = vmatprep.subr.mxu0 0.0
        %v1080 = vand.u32 %v343, 4294901760
        %v1081 = vsub.f32 %v343, %v1080
        %1082 = vmatpush1.msra.mxu0 %v1081
        %1083 = vmatprep.subr.mxu0 0.0
        %v1084 = vand.u32 %v342, 4294901760
        %v1085 = vsub.f32 %v342, %v1084
        %1086 = vmatpush1.msra.mxu0 %v1085
        %1087 = vmatprep.subr.mxu0 0.0
        %v1088 = vand.u32 %v341, 4294901760
        %v1089 = vsub.f32 %v341, %v1088
        %1090 = vmatpush1.msra.mxu0 %v1089
        %1091 = vmatprep.subr.mxu0 0.0
        %1092 = vmatpush2.msra.mxu0 0.0
        %1093 = vmatprep.subr.mxu0 0.0
        %1094 = vmatpush2.msra.mxu0 0.0
        %1095 = vmatprep.subr.mxu0 0.0
        %1096 = vmatpush2.msra.mxu0 0.0
        %1097 = vmatprep.subr.mxu0 0.0
        %1098 = vmatpush2.msra.mxu0 0.0
        %1099 = vmatprep.subr.mxu0 0.0
        %1100 = vmatpush2.msra.mxu0 0.0
        %1101 = vmatprep.subr.mxu0 0.0
        %1102 = vmatpush2.msra.mxu0 0.0
        %1103 = vmatprep.subr.mxu0 0.0
        %1104 = vmatpush2.msra.mxu0 0.0
        %1105 = vmatprep.subr.mxu0 0.0
        %1106 = vmatpush2.msra.mxu0 0.0
        %1107 = vmatprep.subr.mxu0 0.0
        %1108 = vmatpush2.msra.mxu0 0.0
        %1109 = vmatprep.subr.mxu0 0.0
        %1110 = vmatpush2.msra.mxu0 0.0
        %1111 = vmatprep.subr.mxu0 0.0
        %1112 = vmatpush2.msra.mxu0 0.0
        %1113 = vmatprep.subr.mxu0 0.0
        %1114 = vmatpush2.msra.mxu0 0.0
        %1115 = vmatprep.subr.mxu0 0.0
        %1116 = vmatpush2.msra.mxu0 0.0
        %1117 = vmatprep.subr.mxu0 0.0
        %1118 = vmatpush2.msra.mxu0 0.0
        %1119 = vmatprep.subr.mxu0 0.0
        %1120 = vmatpush2.msra.mxu0 0.0
        %1121 = vmatprep.subr.mxu0 0.0
        %1122 = vmatpush2.msra.mxu0 0.0
        %1123 = vmatprep.mubr.f32.mxu0 0.0
        %v1124 = vand.u32 %v869, 4294901760
        %v1125 = vsub.f32 %v869, %v1124
        %1126 = vmatmul.mubr.f32.gmra.mxu0 %v1125
        %v1127 = vpop.f32.mrf.mxu0
        %v1128 = vadd.f32 %v1044, %v1127
        %v1129 = vpop.f32.mrf.mxu0
        %1130 = vmatprep.mubr.f32.mxu0 0.0
        %v1131 = vand.u32 %v871, 4294901760
        %v1132 = vsub.f32 %v871, %v1131
        %1133 = vmatmul.mubr.f32.gmra.mxu0 %v1132
        %v1134 = vpop.f32.mrf.mxu0
        %v1135 = vadd.f32 %v1050, %v1134
        %v1136 = vpop.f32.mrf.mxu0
        %1137 = vdwg.mxu0
        %1138 = vmatprep.subr.mxu0 0.0
        %1139 = vmatpush1.msra.mxu0 0.0
        %1140 = vmatprep.subr.mxu0 0.0
        %1141 = vmatpush1.msra.mxu0 0.0
        %1142 = vmatprep.subr.mxu0 0.0
        %1143 = vmatpush1.msra.mxu0 0.0
        %1144 = vmatprep.subr.mxu0 0.0
        %1145 = vmatpush1.msra.mxu0 0.0
        %1146 = vmatprep.subr.mxu0 0.0
        %1147 = vmatpush1.msra.mxu0 0.0
        %1148 = vmatprep.subr.mxu0 0.0
        %1149 = vmatpush1.msra.mxu0 0.0
        %1150 = vmatprep.subr.mxu0 0.0
        %1151 = vmatpush1.msra.mxu0 0.0
        %1152 = vmatprep.subr.mxu0 0.0
        %1153 = vmatpush1.msra.mxu0 0.0
        %1154 = vmatprep.subr.mxu0 0.0
        %1155 = vmatpush1.msra.mxu0 0.0
        %1156 = vmatprep.subr.mxu0 0.0
        %1157 = vmatpush1.msra.mxu0 0.0
        %1158 = vmatprep.subr.mxu0 0.0
        %1159 = vmatpush1.msra.mxu0 0.0
        %1160 = vmatprep.subr.mxu0 0.0
        %1161 = vmatpush1.msra.mxu0 0.0
        %1162 = vmatprep.subr.mxu0 0.0
        %1163 = vmatpush1.msra.mxu0 0.0
        %1164 = vmatprep.subr.mxu0 0.0
        %v1165 = vand.u32 %v343, 4294901760
        %1166 = vmatpush1.msra.mxu0 %v1165
        %1167 = vmatprep.subr.mxu0 0.0
        %v1168 = vand.u32 %v342, 4294901760
        %1169 = vmatpush1.msra.mxu0 %v1168
        %1170 = vmatprep.subr.mxu0 0.0
        %v1171 = vand.u32 %v341, 4294901760
        %1172 = vmatpush1.msra.mxu0 %v1171
        %1173 = vmatprep.subr.mxu0 0.0
        %1174 = vmatpush2.msra.mxu0 0.0
        %1175 = vmatprep.subr.mxu0 0.0
        %1176 = vmatpush2.msra.mxu0 0.0
        %1177 = vmatprep.subr.mxu0 0.0
        %1178 = vmatpush2.msra.mxu0 0.0
        %1179 = vmatprep.subr.mxu0 0.0
        %1180 = vmatpush2.msra.mxu0 0.0
        %1181 = vmatprep.subr.mxu0 0.0
        %1182 = vmatpush2.msra.mxu0 0.0
        %1183 = vmatprep.subr.mxu0 0.0
        %1184 = vmatpush2.msra.mxu0 0.0
        %1185 = vmatprep.subr.mxu0 0.0
        %1186 = vmatpush2.msra.mxu0 0.0
        %1187 = vmatprep.subr.mxu0 0.0
        %1188 = vmatpush2.msra.mxu0 0.0
        %1189 = vmatprep.subr.mxu0 0.0
        %1190 = vmatpush2.msra.mxu0 0.0
        %1191 = vmatprep.subr.mxu0 0.0
        %1192 = vmatpush2.msra.mxu0 0.0
        %1193 = vmatprep.subr.mxu0 0.0
        %1194 = vmatpush2.msra.mxu0 0.0
        %1195 = vmatprep.subr.mxu0 0.0
        %1196 = vmatpush2.msra.mxu0 0.0
        %1197 = vmatprep.subr.mxu0 0.0
        %1198 = vmatpush2.msra.mxu0 0.0
        %1199 = vmatprep.subr.mxu0 0.0
        %1200 = vmatpush2.msra.mxu0 0.0
        %1201 = vmatprep.subr.mxu0 0.0
        %1202 = vmatpush2.msra.mxu0 0.0
        %1203 = vmatprep.subr.mxu0 0.0
        %1204 = vmatpush2.msra.mxu0 0.0
        %1205 = vmatprep.mubr.f32.mxu0 0.0
        %v1206 = vand.u32 %v869, 4294901760
        %v1207 = vsub.f32 %v869, %v1206
        %v1208 = vand.u32 %v1207, 4294901760
        %1209 = vmatmul.mubr.f32.gmra.mxu0 %v1208
        %v1210 = vpop.f32.mrf.mxu0
        %v1211 = vadd.f32 %v1128, %v1210
        %v1212 = vpop.f32.mrf.mxu0
        %1213 = vmatprep.mubr.f32.mxu0 0.0
        %v1214 = vand.u32 %v871, 4294901760
        %v1215 = vsub.f32 %v871, %v1214
        %v1216 = vand.u32 %v1215, 4294901760
        %1217 = vmatmul.mubr.f32.gmra.mxu0 %v1216
        %v1218 = vpop.f32.mrf.mxu0
        %v1219 = vadd.f32 %v1135, %v1218
        %v1220 = vpop.f32.mrf.mxu0
        %1221 = vdwg.mxu0
        %1222 = vmatprep.subr.mxu0 0.0
        %1223 = vmatpush1.msra.mxu0 0.0
        %1224 = vmatprep.subr.mxu0 0.0
        %1225 = vmatpush1.msra.mxu0 0.0
        %1226 = vmatprep.subr.mxu0 0.0
        %1227 = vmatpush1.msra.mxu0 0.0
        %1228 = vmatprep.subr.mxu0 0.0
        %1229 = vmatpush1.msra.mxu0 0.0
        %1230 = vmatprep.subr.mxu0 0.0
        %1231 = vmatpush1.msra.mxu0 0.0
        %1232 = vmatprep.subr.mxu0 0.0
        %1233 = vmatpush1.msra.mxu0 0.0
        %1234 = vmatprep.subr.mxu0 0.0
        %1235 = vmatpush1.msra.mxu0 0.0
        %1236 = vmatprep.subr.mxu0 0.0
        %1237 = vmatpush1.msra.mxu0 0.0
        %1238 = vmatprep.subr.mxu0 0.0
        %1239 = vmatpush1.msra.mxu0 0.0
        %1240 = vmatprep.subr.mxu0 0.0
        %1241 = vmatpush1.msra.mxu0 0.0
        %1242 = vmatprep.subr.mxu0 0.0
        %1243 = vmatpush1.msra.mxu0 0.0
        %1244 = vmatprep.subr.mxu0 0.0
        %1245 = vmatpush1.msra.mxu0 0.0
        %1246 = vmatprep.subr.mxu0 0.0
        %1247 = vmatpush1.msra.mxu0 0.0
        %1248 = vmatprep.subr.mxu0 0.0
        %v1249 = vand.u32 %v343, 4294901760
        %v1250 = vsub.f32 %v343, %v1249
        %v1251 = vand.u32 %v1250, 4294901760
        %1252 = vmatpush1.msra.mxu0 %v1251
        %1253 = vmatprep.subr.mxu0 0.0
        %v1254 = vand.u32 %v342, 4294901760
        %v1255 = vsub.f32 %v342, %v1254
        %v1256 = vand.u32 %v1255, 4294901760
        %1257 = vmatpush1.msra.mxu0 %v1256
        %1258 = vmatprep.subr.mxu0 0.0
        %v1259 = vand.u32 %v341, 4294901760
        %v1260 = vsub.f32 %v341, %v1259
        %v1261 = vand.u32 %v1260, 4294901760
        %1262 = vmatpush1.msra.mxu0 %v1261
        %1263 = vmatprep.subr.mxu0 0.0
        %1264 = vmatpush2.msra.mxu0 0.0
        %1265 = vmatprep.subr.mxu0 0.0
        %1266 = vmatpush2.msra.mxu0 0.0
        %1267 = vmatprep.subr.mxu0 0.0
        %1268 = vmatpush2.msra.mxu0 0.0
        %1269 = vmatprep.subr.mxu0 0.0
        %1270 = vmatpush2.msra.mxu0 0.0
        %1271 = vmatprep.subr.mxu0 0.0
        %1272 = vmatpush2.msra.mxu0 0.0
        %1273 = vmatprep.subr.mxu0 0.0
        %1274 = vmatpush2.msra.mxu0 0.0
        %1275 = vmatprep.subr.mxu0 0.0
        %1276 = vmatpush2.msra.mxu0 0.0
        %1277 = vmatprep.subr.mxu0 0.0
        %1278 = vmatpush2.msra.mxu0 0.0
        %1279 = vmatprep.subr.mxu0 0.0
        %1280 = vmatpush2.msra.mxu0 0.0
        %1281 = vmatprep.subr.mxu0 0.0
        %1282 = vmatpush2.msra.mxu0 0.0
        %1283 = vmatprep.subr.mxu0 0.0
        %1284 = vmatpush2.msra.mxu0 0.0
        %1285 = vmatprep.subr.mxu0 0.0
        %1286 = vmatpush2.msra.mxu0 0.0
        %1287 = vmatprep.subr.mxu0 0.0
        %1288 = vmatpush2.msra.mxu0 0.0
        %1289 = vmatprep.subr.mxu0 0.0
        %1290 = vmatpush2.msra.mxu0 0.0
        %1291 = vmatprep.subr.mxu0 0.0
        %1292 = vmatpush2.msra.mxu0 0.0
        %1293 = vmatprep.subr.mxu0 0.0
        %1294 = vmatpush2.msra.mxu0 0.0
        %1295 = vmatprep.mubr.f32.mxu0 0.0
        %v1296 = vand.u32 %v869, 4294901760
        %1297 = vmatmul.mubr.f32.gmra.mxu0 %v1296
        %v1298 = vpop.f32.mrf.mxu0
        %v1299 = vadd.f32 %v1211, %v1298
        %v1300 = vpop.f32.mrf.mxu0
        %1301 = vmatprep.mubr.f32.mxu0 0.0
        %v1302 = vand.u32 %v871, 4294901760
        %1303 = vmatmul.mubr.f32.gmra.mxu0 %v1302
        %v1304 = vpop.f32.mrf.mxu0
        %v1305 = vadd.f32 %v1219, %v1304
        %v1306 = vpop.f32.mrf.mxu0
        %1307 = vdwg.mxu0
        %1308 = vmatprep.subr.mxu0 0.0
        %1309 = vmatpush1.msra.mxu0 0.0
        %1310 = vmatprep.subr.mxu0 0.0
        %1311 = vmatpush1.msra.mxu0 0.0
        %1312 = vmatprep.subr.mxu0 0.0
        %1313 = vmatpush1.msra.mxu0 0.0
        %1314 = vmatprep.subr.mxu0 0.0
        %1315 = vmatpush1.msra.mxu0 0.0
        %1316 = vmatprep.subr.mxu0 0.0
        %1317 = vmatpush1.msra.mxu0 0.0
        %1318 = vmatprep.subr.mxu0 0.0
        %1319 = vmatpush1.msra.mxu0 0.0
        %1320 = vmatprep.subr.mxu0 0.0
        %1321 = vmatpush1.msra.mxu0 0.0
        %1322 = vmatprep.subr.mxu0 0.0
        %1323 = vmatpush1.msra.mxu0 0.0
        %1324 = vmatprep.subr.mxu0 0.0
        %1325 = vmatpush1.msra.mxu0 0.0
        %1326 = vmatprep.subr.mxu0 0.0
        %1327 = vmatpush1.msra.mxu0 0.0
        %1328 = vmatprep.subr.mxu0 0.0
        %1329 = vmatpush1.msra.mxu0 0.0
        %1330 = vmatprep.subr.mxu0 0.0
        %1331 = vmatpush1.msra.mxu0 0.0
        %1332 = vmatprep.subr.mxu0 0.0
        %1333 = vmatpush1.msra.mxu0 0.0
        %1334 = vmatprep.subr.mxu0 0.0
        %v1335 = vand.u32 %v343, 4294901760
        %1336 = vmatpush1.msra.mxu0 %v1335
        %1337 = vmatprep.subr.mxu0 0.0
        %v1338 = vand.u32 %v342, 4294901760
        %1339 = vmatpush1.msra.mxu0 %v1338
        %1340 = vmatprep.subr.mxu0 0.0
        %v1341 = vand.u32 %v341, 4294901760
        %1342 = vmatpush1.msra.mxu0 %v1341
        %1343 = vmatprep.subr.mxu0 0.0
        %1344 = vmatpush2.msra.mxu0 0.0
        %1345 = vmatprep.subr.mxu0 0.0
        %1346 = vmatpush2.msra.mxu0 0.0
        %1347 = vmatprep.subr.mxu0 0.0
        %1348 = vmatpush2.msra.mxu0 0.0
        %1349 = vmatprep.subr.mxu0 0.0
        %1350 = vmatpush2.msra.mxu0 0.0
        %1351 = vmatprep.subr.mxu0 0.0
        %1352 = vmatpush2.msra.mxu0 0.0
        %1353 = vmatprep.subr.mxu0 0.0
        %1354 = vmatpush2.msra.mxu0 0.0
        %1355 = vmatprep.subr.mxu0 0.0
        %1356 = vmatpush2.msra.mxu0 0.0
        %1357 = vmatprep.subr.mxu0 0.0
        %1358 = vmatpush2.msra.mxu0 0.0
        %1359 = vmatprep.subr.mxu0 0.0
        %1360 = vmatpush2.msra.mxu0 0.0
        %1361 = vmatprep.subr.mxu0 0.0
        %1362 = vmatpush2.msra.mxu0 0.0
        %1363 = vmatprep.subr.mxu0 0.0
        %1364 = vmatpush2.msra.mxu0 0.0
        %1365 = vmatprep.subr.mxu0 0.0
        %1366 = vmatpush2.msra.mxu0 0.0
        %1367 = vmatprep.subr.mxu0 0.0
        %1368 = vmatpush2.msra.mxu0 0.0
        %1369 = vmatprep.subr.mxu0 0.0
        %1370 = vmatpush2.msra.mxu0 0.0
        %1371 = vmatprep.subr.mxu0 0.0
        %1372 = vmatpush2.msra.mxu0 0.0
        %1373 = vmatprep.subr.mxu0 0.0
        %1374 = vmatpush2.msra.mxu0 0.0
        %1375 = vmatprep.mubr.f32.mxu0 0.0
        %v1376 = vand.u32 %v869, 4294901760
        %1377 = vmatmul.mubr.f32.gmra.mxu0 %v1376
        %v1378 = vpop.f32.mrf.mxu0
        %v1379 = vadd.f32 %v1299, %v1378
        %v1380 = vpop.f32.mrf.mxu0
        %1381 = vmatprep.mubr.f32.mxu0 0.0
        %v1382 = vand.u32 %v871, 4294901760
        %1383 = vmatmul.mubr.f32.gmra.mxu0 %v1382
        %v1384 = vpop.f32.mrf.mxu0
        %v1385 = vadd.f32 %v1305, %v1384
        %v1386 = vpop.f32.mrf.mxu0
        %1387 = vdwg.mxu0
        %v1389 = vrot.slane %v343, 4
        %v1391 = vmax.f32 %v343, %v1389
        %v1392 = vrot.slane %v350, 4
        %v1394 = vmax.f32 %v348, %v1392
        %v1396 = vrot.slane %v1394, 4
        %v1398 = vmax.f32 %v1391, %v1396
        %v1400 = vlaneseq
        %v1401 = vshrl.u32 %v1400, 7
        %v1402 = vsub.s32 0, %v1401
        %v1403 = vrot.slane %v346, %v1402
        %v1405 = vmul.f32 %v1398, %v1403
        %v1406 = vmul.f32 %v1379, %v1403
        %v1407 = vmul.f32 %v1385, %v1403
        %1408 = vst [vmem:[%s296] sm:$0xf] %v1405
        %1409 = vst [vmem:[%s296 + $0x4] sm:$0xff] %v1406
        %1410 = vst [vmem:[%s296 + $0xc] sm:$0xf] %v1407
        %p1411 = scmp.eq.s32.totalorder %s31, 0
        // Predicated region
        $region41: #{tpu_custom_call.1} parent=31 // pred_check
          %p1412 = pneg %p1411
        $region42: #{tpu_custom_call.1} parent=31 // pred_check_branch
          %1414 = sbr.rel (%p1412) target = $region44
        $region43: #{tpu_custom_call.1} parent=31 // pred_region
          %vm1415 = vcmask 7168
          %1416 = vst.msk [vmem:[%s331] sm:$0xff] %vm1415, 0.0
          %1417 = vst.msk [vmem:[%s331 + $0x8] sm:$0xff] %vm1415, 0.0
          %1418 = vst.msk [vmem:[%s340] sm:$0xff] %vm1415, 0.0
          %1419 = vst.msk [vmem:[%s340 + $0x8] sm:$0xff] %vm1415, 0.0
        $region44: #{tpu_custom_call.1} parent=31 // pred_fallthru
          _
        %v1420 = vsel %vm362, %v1405, 0.0
        %1421 = vadd.xlane.f32.xlu0 %v1420
        %v1422 = vpop.xlane.xlu0 %1421
        %1423 = vadd.xlane.f32.xlu0 %v1406
        %v1424 = vpop.xlane.xlu0 %1423
        %v1425 = vsel %vm362, %v1407, 0.0
        %1426 = vadd.xlane.f32.xlu0 %v1425
        %v1427 = vpop.xlane.xlu0 %1426
        %v1428 = vmul.f32 %v1405, %v1405
        %v1429 = vsel %vm362, %v1428, 0.0
        %1430 = vadd.xlane.f32.xlu0 %v1429
        %v1431 = vpop.xlane.xlu0 %1430
        %v1432 = vmul.f32 %v1406, %v1406
        %v1433 = vmul.f32 %v1407, %v1407
        %1434 = vadd.xlane.f32.xlu0 %v1432
        %v1435 = vpop.xlane.xlu0 %1434
        %v1436 = vsel %vm362, %v1433, 0.0
        %1437 = vadd.xlane.f32.xlu0 %v1436
        %v1438 = vpop.xlane.xlu0 %1437
        %v1439 = vld [vmem:[%s331] sm:$0xff]
        %v1440 = vld [vmem:[%s331 + $0x8] sm:$0xff]
        %v1443 = vrot.slane %v1424, 4
        %v1444 = vrot.slane %v1427, 4
        %v1445 = vsel %vm362, %v1443, %v1444
        %v1448 = vsel %vm362, %v1422, %v1443
        %v1449 = vadd.f32 %v1439, %v1448
        %v1450 = vadd.f32 %v1440, %v1445
        %vm1451 = vcmask 7168
        %1452 = vst.msk [vmem:[%s331] sm:$0xff] %vm1451, %v1449
        %1453 = vst.msk [vmem:[%s331 + $0x8] sm:$0xff] %vm1451, %v1450
        %v1454 = vld [vmem:[%s340] sm:$0xff]
        %v1455 = vld [vmem:[%s340 + $0x8] sm:$0xff]
        %v1458 = vrot.slane %v1435, 4
        %v1459 = vrot.slane %v1438, 4
        %v1460 = vsel %vm362, %v1458, %v1459
        %v1463 = vsel %vm362, %v1431, %v1458
        %v1464 = vadd.f32 %v1454, %v1463
        %v1465 = vadd.f32 %v1455, %v1460
        %1466 = vst.msk [vmem:[%s340] sm:$0xff] %vm1451, %v1464
        %1467 = vst.msk [vmem:[%s340 + $0x8] sm:$0xff] %vm1451, %v1465
        %s1468 = sand.u32 %s131, 1
        %s1469 = scalar_lea.sflag [#allocation4], %s1468
        %s1470 = sand.u32 %s131, 1
        %s1471 = smul.addr %s1470, 16
        %s1472 = scalar_lea.vmem [#allocation7], %s1471
        %p1473 = scmp.lt.s32.totalorder %s29, 1
        %s1474 = scalar_select %p1473, %s29, 1
        %p1475 = scmp.lt.s32.totalorder %s30, 1
        %s1476 = scalar_select %p1475, %s30, 1
        %s1477 = smul.addr %s1476, 2
        %s1478 = smul.addr %s1474, 4
        %s1479 = sadd.s32 %s1477, %s1478
        %s1480 = smul.addr %s1479, 8
        %s1481 = scalar_lea.vmem %s4, %s1480
        %p1482 = scmp.lt.s32.totalorder %s29, 1
        %s1483 = scalar_select %p1482, %s29, 1
        %p1484 = scmp.lt.s32.totalorder %s30, 1
        %s1485 = scalar_select %p1484, %s30, 1
        %s1486 = smul.addr %s1485, 2
        %s1487 = smul.addr %s1483, 4
        %s1488 = sadd.s32 %s1486, %s1487
        %s1489 = smul.addr %s1488, 8
        %s1490 = scalar_lea.vmem %s5, %s1489
        // Predicated region
        $region45: #{tpu_custom_call.1} parent=31 // pred_check
          %p1491 = pneg %p141
        $region46: #{tpu_custom_call.1} parent=31 // pred_check_branch
          %1493 = sbr.rel (%p1491) target = $region48
        $region47: #{tpu_custom_call.1} parent=31 // pred_region
          %s1494 = smul.u32 %s30, 2
          %s1495 = sadd.s32 %s1494, %s31
          %s1497 = ssub.s32 256, 256
          %1498 = vsyncadd %s1469, %s1497
          %s1499 = smul.addr %s29, 8
          %s1500 = sadd.s32 %s1495, %s1499
          %s1501 = smul.addr %s1500, 128
          %s1502 = scalar_lea.hbm %s3, %s1501
          %s1503 = sshll.u32 %s1472, 4
          %s1504 = int_to_ptr.vmem [resolvable:$true] %s1503
          %1509 = dma.vmem_to_hbm [thread:$0]  %s1504, 256, %s1502, %s1469, 128, 512, 8
        $region48: #{tpu_custom_call.1} parent=31 // pred_fallthru
          _
        // Predicated region
        $region49: #{tpu_custom_call.1} parent=31 // pred_check
          %p1510 = pneg %p169
        $region50: #{tpu_custom_call.1} parent=31 // pred_check_branch
          %1512 = sbr.rel (%p1510) target = $region52
        $region51: #{tpu_custom_call.1} parent=31 // pred_region
          _
        $region52: #{tpu_custom_call.1} parent=31 // pred_fallthru
          _
        // Predicated region
        $region53: #{tpu_custom_call.1} parent=31 // pred_check
          %p1513 = pneg %p197
        $region54: #{tpu_custom_call.1} parent=31 // pred_check_branch
          %1515 = sbr.rel (%p1513) target = $region56
        $region55: #{tpu_custom_call.1} parent=31 // pred_region
          _
        $region56: #{tpu_custom_call.1} parent=31 // pred_fallthru
          _
      $region32: #{tpu_custom_call.1} parent=5 // pred_fallthru
        _
      %p1516 = scmp.le.s32.totalorder 2, %s19
      // Predicated region
      $region57: #{tpu_custom_call.1} parent=5 // pred_check
        %p1517 = pneg %p1516
      $region58: #{tpu_custom_call.1} parent=5 // pred_check_branch
        %1519 = sbr.rel (%p1517) target = $region60
      $region59: #{tpu_custom_call.1} parent=5 // pred_region
        %s1520 = ssub.s32 %s19, 2
        // Predicated region
        $region61: #{tpu_custom_call.1} parent=59 // pred_check
          %p1521 = pneg %p147
        $region62: #{tpu_custom_call.1} parent=59 // pred_check_branch
          %1523 = sbr.rel (%p1521) target = $region64
        $region63: #{tpu_custom_call.1} parent=59 // pred_region
          %s1524 = sand.u32 %s132, 1
          %s1525 = scalar_lea.sflag [#allocation4], %s1524
          %s1526 = sand.u32 %s132, 1
          %s1527 = smul.addr %s1526, 16
          %s1528 = scalar_lea.vmem [#allocation7], %s1527
          %1529 = dma.done %s1525, 256
        $region64: #{tpu_custom_call.1} parent=59 // pred_fallthru
          _
        // Predicated region
        $region65: #{tpu_custom_call.1} parent=59 // pred_check
          %p1530 = pneg %p175
        $region66: #{tpu_custom_call.1} parent=59 // pred_check_branch
          %1532 = sbr.rel (%p1530) target = $region68
        $region67: #{tpu_custom_call.1} parent=59 // pred_region
          %p1533 = scmp.lt.s32.totalorder %s32, 1
          %s1534 = scalar_select %p1533, %s32, 1
          %p1535 = scmp.lt.s32.totalorder %s33, 1
          %s1536 = scalar_select %p1535, %s33, 1
          %s1537 = smul.addr %s1536, 2
          %s1538 = smul.addr %s1534, 4
          %s1539 = sadd.s32 %s1537, %s1538
          %s1540 = smul.addr %s1539, 8
          %s1541 = scalar_lea.vmem %s4, %s1540
        $region68: #{tpu_custom_call.1} parent=59 // pred_fallthru
          _
        // Predicated region
        $region69: #{tpu_custom_call.1} parent=59 // pred_check
          %p1542 = pneg %p203
        $region70: #{tpu_custom_call.1} parent=59 // pred_check_branch
          %1544 = sbr.rel (%p1542) target = $region72
        $region71: #{tpu_custom_call.1} parent=59 // pred_region
          %p1545 = scmp.lt.s32.totalorder %s32, 1
          %s1546 = scalar_select %p1545, %s32, 1
          %p1547 = scmp.lt.s32.totalorder %s33, 1
          %s1548 = scalar_select %p1547, %s33, 1
          %s1549 = smul.addr %s1548, 2
          %s1550 = smul.addr %s1546, 4
          %s1551 = sadd.s32 %s1549, %s1550
          %s1552 = smul.addr %s1551, 8
          %s1553 = scalar_lea.vmem %s5, %s1552
        $region72: #{tpu_custom_call.1} parent=59 // pred_fallthru
          _
      $region60: #{tpu_custom_call.1} parent=5 // pred_fallthru
        _
    $region6: #{tpu_custom_call.1} parent=1 // loop_footer
      %s23 = sadd.s32 1, %s19
    $region7: #{tpu_custom_call.1} parent=1 // loop_footer_branch
      %18 = sbr.rel target = $region3
    $region8: #{tpu_custom_call.1} parent=1 // loop_exit
      _
    %1554 = vsyncpa [#allocation3], 1
    %s1555 = scalar_lea.sflag [#allocation3], 1
    %1556 = vsyncpa %s1555, 1
    %1557 = vsyncpa [#allocation6], 1
    %1558 = vsyncpa [#allocation4], 1
    %s1559 = scalar_lea.sflag [#allocation4], 1
    %1560 = vsyncpa %s1559, 1

</llo_original>
